<compile_context>
chip_gen: v7x
topology: tpu7x:2x2x1
jax: 0.10.0
libtpu: 0.0.40
codegen_flags: <defaults>
</compile_context>

<pallas_src>
import jax
import jax.numpy as jnp
from jax import lax
from jax.experimental import pallas as pl
from jax.experimental.pallas import tpu as pltpu


def _round_up(v, m):
    return (v + m - 1) // m * m


def _build_kernel(layer_meta):
    """layer_meta: static tuple of (cin, cout, kpad, w_row_off) per conv layer."""

    def kernel(x_ref, w_ref, b_ref, out_ref):
        h = x_ref[...]                                            # (L, C_in) f32, channels on lanes
        for i, (cin, cout, kpad, woff) in enumerate(layer_meta):
            L = h.shape[0]
            # Neighbour rows via XLU sublane rotation; zero the wrapped boundary row.
            rows = lax.broadcasted_iota(jnp.int32, (L, cin), 0)
            x_prev = jnp.where(rows == 0, 0.0, pltpu.roll(h, 1, axis=0))        # h[t-1]
            x_next = jnp.where(rows == L - 1, 0.0, pltpu.roll(h, L - 1, axis=0))  # h[t+1]
            parts = [x_prev, h, x_next]
            if kpad > 3 * cin:                                    # pad stacked K to 16-aligned
                parts.append(jnp.zeros((L, kpad - 3 * cin), jnp.float32))
            x_stk = jnp.concatenate(parts, axis=-1)               # (L, kpad), lane concat only
            # Conv1d(k=3, pad=1) == ONE stacked-K matmul (bf16 operands, f32 accumulate).
            w = w_ref[woff:woff + kpad, 0:cout]                   # (kpad, cout) bf16
            y = jnp.dot(x_stk.astype(jnp.bfloat16), w,
                        preferred_element_type=jnp.float32)       # (L, cout) f32
            y = jnp.maximum(y + b_ref[i:i + 1, 0:cout], 0.0)      # bias + ReLU (f32)
            # MaxPool1d(kernel_size=2, stride=2) over adjacent tokens.
            h = jnp.max(y.reshape(L // 2, 2, cout), axis=1)       # (L//2, cout)
        out_ref[...] = h                                          # (L/16, C_out)

    return kernel


def pack_params(params):
    """One-time conversion of PyTorch Conv1d params (w: (Cout,Cin,3), b: (Cout,)) into
    MXU-ready slabs.  Call ONCE at model-load time, not per forward pass."""
    chans = [params['w1'].shape[1]] + [params[f'w{i}'].shape[0] for i in range(1, 5)]
    meta = []
    off = 0
    for i in range(4):
        cin, cout = chans[i], chans[i + 1]
        kpad = _round_up(3 * cin, 16)                             # 16-row-aligned bf16 blocks
        meta.append((cin, cout, kpad, off))
        off += kpad
    w_rows = _round_up(off, 16)
    cols = _round_up(max(chans[1:]), 128)
    Wp = jnp.zeros((w_rows, cols), jnp.float32)
    Bp = jnp.zeros((8, cols), jnp.float32)
    for i, (cin, cout, kpad, woff) in enumerate(meta):
        w = params[f'w{i + 1}']                                   # (cout, cin, 3)
        # stacked layout: rows [k*cin:(k+1)*cin] = w[:, :, k].T  -> pairs with x[t+k-1]
        w_stacked = jnp.concatenate([w[:, :, k].T for k in range(3)], axis=0)  # (3cin, cout)
        Wp = Wp.at[woff:woff + 3 * cin, :cout].set(w_stacked)
        Bp = Bp.at[i, :cout].set(params[f'b{i + 1}'])
    return Wp.astype(jnp.bfloat16), Bp, tuple(meta)


def cnn_feature_extractor_forward(x, packed):
    """x: (N, C_in, L) exactly as the PyTorch module receives it.
    packed: result of pack_params(params).  Returns (N, C_out, L // 16)."""
    Wp, Bp, meta = packed
    N, c_in, L = x.shape
    assert L % 16 == 0, "length must survive four /2 max-pools"
    assert meta[0][0] == c_in
    c_out = meta[-1][1]

    x_t = jnp.transpose(x, (0, 2, 1)).astype(jnp.float32)         # (N, L, C_in): channels -> lanes
    out = pl.pallas_call(
        _build_kernel(meta),
        out_shape=jax.ShapeDtypeStruct((N, L // 16, c_out), jnp.float32),
        grid=(N,),
        in_specs=[
            pl.BlockSpec((None, L, c_in), lambda n: (n, 0, 0)),   # per-batch block, squeezed
            pl.BlockSpec(Wp.shape, lambda n: (0, 0)),             # weight slab, grid-resident
            pl.BlockSpec(Bp.shape, lambda n: (0, 0)),             # bias slab, grid-resident
        ],
        out_specs=pl.BlockSpec((None, L // 16, c_out), lambda n: (n, 0, 0)),
        compiler_params=pltpu.CompilerParams(dimension_semantics=("parallel",)),
    )(x_t, Wp, Bp)
    return jnp.transpose(out, (0, 2, 1))                          # back to torch layout (N, C_out, L/16)


def init_params(key, input_channels, output_channels):
    """Deterministic params with PyTorch-compatible shapes."""
    chans = [input_channels, 32, 64, 128, output_channels]
    keys = jax.random.split(key, 8)
    p = {}
    for i in range(4):
        cin, cout = chans[i], chans[i + 1]
        p[f'w{i + 1}'] = 0.05 * jax.random.normal(keys[2 * i], (cout, cin, 3), jnp.float32)
        p[f'b{i + 1}'] = 0.05 * jax.random.normal(keys[2 * i + 1], (cout,), jnp.float32)
    return p


def reference_forward(x, params):
    """Pure-JAX mirror of the PyTorch forward for validation (HIGHEST-precision f32)."""
    h = x
    for i in range(1, 5):
        w = params[f'w{i}']
        b = params[f'b{i}']
        h = lax.conv_general_dilated(
            h, w, window_strides=(1,), padding=[(1, 1)],
            dimension_numbers=('NCH', 'OIH', 'NCH'),
            precision=lax.Precision.HIGHEST)
        h = jnp.maximum(h + b[None, :, None], 0.0)
        n, c, l = h.shape
        h = jnp.max(h.reshape(n, c, l // 2, 2), axis=-1)
    return h


if __name__ == "__main__":
    key = jax.random.PRNGKey(0)
    k_x, k_p = jax.random.split(key)

    N, C_IN, L, C_OUT = 2, 4, 64, 64                              # x: (batch, channels, length)
    x = jax.random.normal(k_x, (N, C_IN, L), dtype=jnp.float32)
    params = init_params(k_p, C_IN, C_OUT)

    packed = pack_params(params)            # one-time packing, outside the per-call forward path
    out = cnn_feature_extractor_forward(x, packed)
    out = jax.block_until_ready(out)

    ref = reference_forward(x, params)
    assert out.shape == (N, C_OUT, L // 16), out.shape
    # bf16 MXU operands + f32 accumulation vs. a Precision.HIGHEST f32 reference:
    # documented tolerance 5e-3 (observed error ~1e-3 at these value scales).
    if not bool(jnp.allclose(out, ref, atol=5e-3, rtol=5e-3)):
        err = float(jnp.max(jnp.abs(out - ref)))
        raise AssertionError(f"Pallas kernel output mismatch vs reference (max abs err {err})")
    print("KERNEL_OK")
</pallas_src>

<mosaic_0001>
module attributes {stable_mosaic.version = 11 : i64} {
  func.func @kernel(%arg0: i32, %arg1: memref<1x64x4xf32, #tpu.memory_space<vmem>>, %arg2: memref<688x128xbf16, #tpu.memory_space<vmem>>, %arg3: memref<8x128xf32, #tpu.memory_space<vmem>>, %arg4: memref<1x4x64xf32, #tpu.memory_space<vmem>>) attributes {dimension_semantics = [#tpu.dimension_semantics<parallel>], iteration_bounds = array<i64: 2>, scalar_prefetch = 0 : i64, scratch_operands = 0 : i64, tpu.core_type = #tpu.core_type<tc>, window_params = [{transform_indices = @transform_0, window_bounds = array<i64: 1, 64, 4>}, {pipeline_mode = #tpu.pipeline_mode<synchronous>, transform_indices = @transform_1, window_bounds = array<i64: 688, 128>}, {pipeline_mode = #tpu.pipeline_mode<synchronous>, transform_indices = @transform_2, window_bounds = array<i64: 8, 128>}, {transform_indices = @transform_3, window_bounds = array<i64: 1, 4, 64>}]} {
    %c0 = arith.constant 0 : index
    %c0_0 = arith.constant 0 : index
    %c0_1 = arith.constant 0 : index
    %0 = vector.load %arg1[%c0, %c0_0, %c0_1] : memref<1x64x4xf32, #tpu.memory_space<vmem>>, vector<1x64x4xf32>
    %1 = vector.shape_cast %0 : vector<1x64x4xf32> to vector<64x4xf32>
    %2 = tpu.iota {dimensions = array<i32: 0>} : vector<64x4xi32>
    %c0_i32 = arith.constant 0 : i32
    %3 = vector.broadcast %c0_i32 : i32 to vector<64x4xi32>
    %4 = arith.cmpi eq, %2, %3 : vector<64x4xi32>
    %c1_i32 = arith.constant 1 : i32
    %5 = tpu.dynamic_rotate %1 by %c1_i32 dim 0 : vector<64x4xf32>, i32 -> vector<64x4xf32>
    %cst = arith.constant 0.000000e+00 : f32
    %6 = vector.broadcast %cst : f32 to vector<64x4xf32>
    %7 = arith.select %4, %6, %5 : vector<64x4xi1>, vector<64x4xf32>
    %c63_i32 = arith.constant 63 : i32
    %8 = vector.broadcast %c63_i32 : i32 to vector<64x4xi32>
    %9 = arith.cmpi eq, %2, %8 : vector<64x4xi32>
    %c63_i32_2 = arith.constant 63 : i32
    %10 = tpu.dynamic_rotate %1 by %c63_i32_2 dim 0 : vector<64x4xf32>, i32 -> vector<64x4xf32>
    %cst_3 = arith.constant 0.000000e+00 : f32
    %11 = vector.broadcast %cst_3 : f32 to vector<64x4xf32>
    %12 = arith.select %9, %11, %10 : vector<64x4xi1>, vector<64x4xf32>
    %cst_4 = arith.constant 0.000000e+00 : f32
    %13 = vector.broadcast %cst_4 : f32 to vector<64x4xf32>
    %14 = tpu.concatenate %7, %1, %12, %13 in 1 : vector<64x4xf32>, vector<64x4xf32>, vector<64x4xf32>, vector<64x4xf32> -> vector<64x16xf32>
    %c0_5 = arith.constant 0 : index
    %c0_6 = arith.constant 0 : index
    %15 = vector.load %arg2[%c0_5, %c0_6] : memref<688x128xbf16, #tpu.memory_space<vmem>>, vector<16x32xbf16>
    %16 = arith.truncf %14 : vector<64x16xf32> to vector<64x16xbf16>
    %cst_7 = arith.constant dense<0.000000e+00> : vector<64x32xf32>
    %17 = tpu.matmul %16, %15, %cst_7 {dimension_numbers = #tpu.dot_dimension_numbers<[1], [0], [0], [1], [0, 0, 1, 1], [], []>} : vector<64x16xbf16>, vector<16x32xbf16>, vector<64x32xf32> -> vector<64x32xf32>
    %c0_8 = arith.constant 0 : index
    %c0_9 = arith.constant 0 : index
    %18 = vector.load %arg3[%c0_8, %c0_9] : memref<8x128xf32, #tpu.memory_space<vmem>>, vector<1x32xf32>
    %19 = vector.broadcast %18 : vector<1x32xf32> to vector<64x32xf32>
    %20 = arith.addf %17, %19 : vector<64x32xf32>
    %cst_10 = arith.constant 0.000000e+00 : f32
    %21 = vector.broadcast %cst_10 : f32 to vector<64x32xf32>
    %22 = arith.maximumf %20, %21 : vector<64x32xf32>
    %23 = vector.shape_cast %22 : vector<64x32xf32> to vector<32x2x32xf32>
    %cst_11 = arith.constant dense<0xFF800000> : vector<32x32xf32>
    %24 = vector.multi_reduction <maximumf>, %23, %cst_11 [1] : vector<32x2x32xf32> to vector<32x32xf32>
    %25 = tpu.iota {dimensions = array<i32: 0>} : vector<32x32xi32>
    %c0_i32_12 = arith.constant 0 : i32
    %26 = vector.broadcast %c0_i32_12 : i32 to vector<32x32xi32>
    %27 = arith.cmpi eq, %25, %26 : vector<32x32xi32>
    %c1_i32_13 = arith.constant 1 : i32
    %28 = tpu.dynamic_rotate %24 by %c1_i32_13 dim 0 : vector<32x32xf32>, i32 -> vector<32x32xf32>
    %cst_14 = arith.constant 0.000000e+00 : f32
    %29 = vector.broadcast %cst_14 : f32 to vector<32x32xf32>
    %30 = arith.select %27, %29, %28 : vector<32x32xi1>, vector<32x32xf32>
    %c31_i32 = arith.constant 31 : i32
    %31 = vector.broadcast %c31_i32 : i32 to vector<32x32xi32>
    %32 = arith.cmpi eq, %25, %31 : vector<32x32xi32>
    %c31_i32_15 = arith.constant 31 : i32
    %33 = tpu.dynamic_rotate %24 by %c31_i32_15 dim 0 : vector<32x32xf32>, i32 -> vector<32x32xf32>
    %cst_16 = arith.constant 0.000000e+00 : f32
    %34 = vector.broadcast %cst_16 : f32 to vector<32x32xf32>
    %35 = arith.select %32, %34, %33 : vector<32x32xi1>, vector<32x32xf32>
    %36 = tpu.concatenate %30, %24, %35 in 1 : vector<32x32xf32>, vector<32x32xf32>, vector<32x32xf32> -> vector<32x96xf32>
    %c16 = arith.constant 16 : index
    %c0_17 = arith.constant 0 : index
    %37 = vector.load %arg2[%c16, %c0_17] : memref<688x128xbf16, #tpu.memory_space<vmem>>, vector<96x64xbf16>
    %38 = arith.truncf %36 : vector<32x96xf32> to vector<32x96xbf16>
    %cst_18 = arith.constant dense<0.000000e+00> : vector<32x64xf32>
    %39 = tpu.matmul %38, %37, %cst_18 {dimension_numbers = #tpu.dot_dimension_numbers<[1], [0], [0], [1], [0, 0, 1, 1], [], []>} : vector<32x96xbf16>, vector<96x64xbf16>, vector<32x64xf32> -> vector<32x64xf32>
    %c1 = arith.constant 1 : index
    %c0_19 = arith.constant 0 : index
    %40 = vector.load %arg3[%c1, %c0_19] : memref<8x128xf32, #tpu.memory_space<vmem>>, vector<1x64xf32>
    %41 = vector.broadcast %40 : vector<1x64xf32> to vector<32x64xf32>
    %42 = arith.addf %39, %41 : vector<32x64xf32>
    %cst_20 = arith.constant 0.000000e+00 : f32
    %43 = vector.broadcast %cst_20 : f32 to vector<32x64xf32>
    %44 = arith.maximumf %42, %43 : vector<32x64xf32>
    %45 = vector.shape_cast %44 : vector<32x64xf32> to vector<16x2x64xf32>
    %cst_21 = arith.constant dense<0xFF800000> : vector<16x64xf32>
    %46 = vector.multi_reduction <maximumf>, %45, %cst_21 [1] : vector<16x2x64xf32> to vector<16x64xf32>
    %47 = tpu.iota {dimensions = array<i32: 0>} : vector<16x64xi32>
    %c0_i32_22 = arith.constant 0 : i32
    %48 = vector.broadcast %c0_i32_22 : i32 to vector<16x64xi32>
    %49 = arith.cmpi eq, %47, %48 : vector<16x64xi32>
    %c1_i32_23 = arith.constant 1 : i32
    %50 = tpu.dynamic_rotate %46 by %c1_i32_23 dim 0 : vector<16x64xf32>, i32 -> vector<16x64xf32>
    %cst_24 = arith.constant 0.000000e+00 : f32
    %51 = vector.broadcast %cst_24 : f32 to vector<16x64xf32>
    %52 = arith.select %49, %51, %50 : vector<16x64xi1>, vector<16x64xf32>
    %c15_i32 = arith.constant 15 : i32
    %53 = vector.broadcast %c15_i32 : i32 to vector<16x64xi32>
    %54 = arith.cmpi eq, %47, %53 : vector<16x64xi32>
    %c15_i32_25 = arith.constant 15 : i32
    %55 = tpu.dynamic_rotate %46 by %c15_i32_25 dim 0 : vector<16x64xf32>, i32 -> vector<16x64xf32>
    %cst_26 = arith.constant 0.000000e+00 : f32
    %56 = vector.broadcast %cst_26 : f32 to vector<16x64xf32>
    %57 = arith.select %54, %56, %55 : vector<16x64xi1>, vector<16x64xf32>
    %58 = tpu.concatenate %52, %46, %57 in 1 : vector<16x64xf32>, vector<16x64xf32>, vector<16x64xf32> -> vector<16x192xf32>
    %c112 = arith.constant 112 : index
    %c0_27 = arith.constant 0 : index
    %59 = vector.load %arg2[%c112, %c0_27] : memref<688x128xbf16, #tpu.memory_space<vmem>>, vector<192x128xbf16>
    %60 = arith.truncf %58 : vector<16x192xf32> to vector<16x192xbf16>
    %cst_28 = arith.constant dense<0.000000e+00> : vector<16x128xf32>
    %61 = tpu.matmul %60, %59, %cst_28 {dimension_numbers = #tpu.dot_dimension_numbers<[1], [0], [0], [1], [0, 0, 1, 1], [], []>} : vector<16x192xbf16>, vector<192x128xbf16>, vector<16x128xf32> -> vector<16x128xf32>
    %c2 = arith.constant 2 : index
    %c0_29 = arith.constant 0 : index
    %62 = vector.load %arg3[%c2, %c0_29] : memref<8x128xf32, #tpu.memory_space<vmem>>, vector<1x128xf32>
    %63 = vector.broadcast %62 : vector<1x128xf32> to vector<16x128xf32>
    %64 = arith.addf %61, %63 : vector<16x128xf32>
    %cst_30 = arith.constant 0.000000e+00 : f32
    %65 = vector.broadcast %cst_30 : f32 to vector<16x128xf32>
    %66 = arith.maximumf %64, %65 : vector<16x128xf32>
    %67 = vector.shape_cast %66 : vector<16x128xf32> to vector<8x2x128xf32>
    %cst_31 = arith.constant dense<0xFF800000> : vector<8x128xf32>
    %68 = vector.multi_reduction <maximumf>, %67, %cst_31 [1] : vector<8x2x128xf32> to vector<8x128xf32>
    %69 = tpu.iota {dimensions = array<i32: 0>} : vector<8x128xi32>
    %c0_i32_32 = arith.constant 0 : i32
    %70 = vector.broadcast %c0_i32_32 : i32 to vector<8x128xi32>
    %71 = arith.cmpi eq, %69, %70 : vector<8x128xi32>
    %c1_i32_33 = arith.constant 1 : i32
    %72 = tpu.dynamic_rotate %68 by %c1_i32_33 dim 0 : vector<8x128xf32>, i32 -> vector<8x128xf32>
    %cst_34 = arith.constant 0.000000e+00 : f32
    %73 = vector.broadcast %cst_34 : f32 to vector<8x128xf32>
    %74 = arith.select %71, %73, %72 : vector<8x128xi1>, vector<8x128xf32>
    %c7_i32 = arith.constant 7 : i32
    %75 = vector.broadcast %c7_i32 : i32 to vector<8x128xi32>
    %76 = arith.cmpi eq, %69, %75 : vector<8x128xi32>
    %c7_i32_35 = arith.constant 7 : i32
    %77 = tpu.dynamic_rotate %68 by %c7_i32_35 dim 0 : vector<8x128xf32>, i32 -> vector<8x128xf32>
    %cst_36 = arith.constant 0.000000e+00 : f32
    %78 = vector.broadcast %cst_36 : f32 to vector<8x128xf32>
    %79 = arith.select %76, %78, %77 : vector<8x128xi1>, vector<8x128xf32>
    %80 = tpu.concatenate %74, %68, %79 in 1 : vector<8x128xf32>, vector<8x128xf32>, vector<8x128xf32> -> vector<8x384xf32>
    %c304 = arith.constant 304 : index
    %c0_37 = arith.constant 0 : index
    %81 = vector.load %arg2[%c304, %c0_37] : memref<688x128xbf16, #tpu.memory_space<vmem>>, vector<384x64xbf16>
    %82 = arith.truncf %80 : vector<8x384xf32> to vector<8x384xbf16>
    %cst_38 = arith.constant dense<0.000000e+00> : vector<8x64xf32>
    %83 = tpu.matmul %82, %81, %cst_38 {dimension_numbers = #tpu.dot_dimension_numbers<[1], [0], [0], [1], [0, 0, 1, 1], [], []>} : vector<8x384xbf16>, vector<384x64xbf16>, vector<8x64xf32> -> vector<8x64xf32>
    %c3 = arith.constant 3 : index
    %c0_39 = arith.constant 0 : index
    %84 = vector.load %arg3[%c3, %c0_39] : memref<8x128xf32, #tpu.memory_space<vmem>>, vector<1x64xf32>
    %85 = vector.broadcast %84 : vector<1x64xf32> to vector<8x64xf32>
    %86 = arith.addf %83, %85 : vector<8x64xf32>
    %cst_40 = arith.constant 0.000000e+00 : f32
    %87 = vector.broadcast %cst_40 : f32 to vector<8x64xf32>
    %88 = arith.maximumf %86, %87 : vector<8x64xf32>
    %89 = vector.shape_cast %88 : vector<8x64xf32> to vector<4x2x64xf32>
    %cst_41 = arith.constant dense<0xFF800000> : vector<4x64xf32>
    %90 = vector.multi_reduction <maximumf>, %89, %cst_41 [1] : vector<4x2x64xf32> to vector<4x64xf32>
    %c0_42 = arith.constant 0 : index
    %c0_43 = arith.constant 0 : index
    %c0_44 = arith.constant 0 : index
    %91 = vector.load %arg4[%c0_42, %c0_43, %c0_44] : memref<1x4x64xf32, #tpu.memory_space<vmem>>, vector<1x4x64xf32>
    %92 = vector.shape_cast %91 : vector<1x4x64xf32> to vector<4x64xf32>
    %93 = vector.shape_cast %90 : vector<4x64xf32> to vector<1x4x64xf32>
    tpu.vector_store %arg4[%c0_42, %c0_43, %c0_44], %93 {strides = array<i32>} : memref<1x4x64xf32, #tpu.memory_space<vmem>>, vector<1x4x64xf32>,
    return
  }
  func.func @transform_0(%arg0: i32) -> (i32, i32, i32) {
    %c0_i32 = arith.constant 0 : i32
    %c0_i32_0 = arith.constant 0 : i32
    %c0_i32_1 = arith.constant 0 : i32
    return %arg0, %c0_i32, %c0_i32_0 : i32, i32, i32
  }
  func.func @transform_1(%arg0: i32) -> (i32, i32) {
    %c0_i32 = arith.constant 0 : i32
    %c0_i32_0 = arith.constant 0 : i32
    %c0_i32_1 = arith.constant 0 : i32
    return %c0_i32, %c0_i32_0 : i32, i32
  }
  func.func @transform_2(%arg0: i32) -> (i32, i32) {
    %c0_i32 = arith.constant 0 : i32
    %c0_i32_0 = arith.constant 0 : i32
    %c0_i32_1 = arith.constant 0 : i32
    return %c0_i32, %c0_i32_0 : i32, i32
  }
  func.func @transform_3(%arg0: i32) -> (i32, i32, i32) {
    %c0_i32 = arith.constant 0 : i32
    %c0_i32_0 = arith.constant 0 : i32
    %c0_i32_1 = arith.constant 0 : i32
    return %arg0, %c0_i32, %c0_i32_0 : i32, i32, i32
  }
}

</mosaic_0001>

<llo_original>
// kernel: tpu_custom_call.1
$region0: #{tpu_custom_call.1}
  #allocation0 [shape = 'u32[]', space=smem, size = 0x4, offset = 0x4, fixed_abs, tag = 'smem constant byte address 0x4 - core index']
  #allocation1 [shape = 'u32[144,128]{1,0:T(1,128)}', space=vmem, size = 0x12000, scoped, tag = 'internal scratch']
  %s0 = inlined_call_operand.vmem [shape: f32[2,64,4], index: 0, kind: input, shape index: {}]
  %s1 = inlined_call_operand.hbm [shape: bf16[688,128], index: 1, kind: input, shape index: {}]
  %s2 = inlined_call_operand.vmem [shape: f32[8,128], index: 2, kind: input, shape index: {}]
  %s3 = inlined_call_operand.hbm [shape: f32[2,4,64], index: 3, kind: output, shape index: {}]
  %s4 = sld [smem:[#allocation0]]
  $region49: #{tpu_custom_call.1} parent=0
    _
  %s6 = ssub.s32 1, %s4
  %s7 = scalar_select 0, %s6, %s4
  $region1: #{tpu_custom_call.1} parent=0
    #allocation2 [shape = 'u8[176128]{0}', space=vmem, size = 0x2b000, scoped, tag = 'input window, operand 1, single buffered']
    #allocation3 [shape = 's32[2]{0}', space=sflag, size = 0x8, scoped, tag = 'scoped memory for tpu_custom_call.1']
    #allocation4 [shape = 's32[2]{0}', space=sflag, size = 0x8, scoped, tag = 'scoped memory for tpu_custom_call.1']
    #allocation5 [shape = 'u8[4096]{0}', space=vmem, size = 0x1000, scoped, tag = 'output window, operand 0']
    %8 = vsyncpa [#allocation3], 0
    %9 = vsyncpa [#allocation4], 0
    %s10 = scalar_lea.sflag [#allocation4], 1
    %11 = vsyncpa %s10, 0
    loop: start=0, step=1, limit=4
    $region2: #{tpu_custom_call.1} parent=1 // loop_pre_header
      _
    $region3: #{tpu_custom_call.1} parent=1 // loop_header
      %s13 = sphi 0, %s17
      %p14 = scmp.ge.s32.totalorder %s13, 4
      %s23 = sphi 0, %s25
      %s26 = sphi 0, %s23
      %s27 = sphi 0, %s26
      %s43 = sphi 0, %s27
      %s47 = sphi 0, %s47
      %s49 = sphi 0, %s47
      %s50 = sphi 0, %s49
      %s64 = sphi 0, %s50
      %s68 = sphi 0, %s68
      %s70 = sphi 0, %s68
      %s71 = sphi 0, %s70
      %s85 = sphi 0, %s71
      %s91 = sphi 0, %s93
      %s94 = sphi 0, %s91
      %s95 = sphi 0, %s94
      %s111 = sphi 0, %s95
    $region4: #{tpu_custom_call.1} parent=1 // loop_header_branch
      %16 = sbr.rel (%p14) target = $region8
    $region5: #{tpu_custom_call.1} parent=1 // loop_body
      %s18 = ssub.s32 %s13, 1
      %s19 = ssub.s32 %s13, 2
      %s20 = sadd.s32 %s13, 1
      %s21 = ssub.s32 %s13, %s20
      %p22 = scmp.eq.s32.totalorder %s21, 0
      %s24 = sadd.s32 %s23, 1
      %s25 = scalar_select %p22, %s23, %s24
      %p28 = pneg %p22
      %p29 = scmp.eq.s32.totalorder %s13, 1
      %p30 = por %p28, %p29
      %p31 = scmp.ne.s32.totalorder %s23, %s26
      %p32 = scmp.eq.s32.totalorder %s13, 0
      %p33 = por %p31, %p32
      %p34 = scmp.ne.s32.totalorder %s23, %s26
      %p35 = scmp.eq.s32.totalorder %s18, 1
      %p36 = por %p34, %p35
      %p37 = scmp.ne.s32.totalorder %s26, %s27
      %p38 = scmp.eq.s32.totalorder %s18, 0
      %p39 = por %p37, %p38
      %p40 = scmp.ne.s32.totalorder %s26, %s27
      %p41 = scmp.eq.s32.totalorder %s19, 1
      %p42 = por %p40, %p41
      %p44 = scmp.ne.s32.totalorder %s27, %s43
      %p45 = scmp.eq.s32.totalorder %s19, 0
      %p46 = por %p44, %p45
      %s48 = sadd.s32 %s47, 1
      %p51 = scmp.eq.s32.totalorder %s13, 1
      %p52 = scmp.ne.s32.totalorder %s47, %s49
      %p53 = scmp.eq.s32.totalorder %s13, 0
      %p54 = por %p52, %p53
      %p55 = scmp.ne.s32.totalorder %s47, %s49
      %p56 = scmp.eq.s32.totalorder %s18, 1
      %p57 = por %p55, %p56
      %p58 = scmp.ne.s32.totalorder %s49, %s50
      %p59 = scmp.eq.s32.totalorder %s18, 0
      %p60 = por %p58, %p59
      %p61 = scmp.ne.s32.totalorder %s49, %s50
      %p62 = scmp.eq.s32.totalorder %s19, 1
      %p63 = por %p61, %p62
      %p65 = scmp.ne.s32.totalorder %s50, %s64
      %p66 = scmp.eq.s32.totalorder %s19, 0
      %p67 = por %p65, %p66
      %s69 = sadd.s32 %s68, 1
      %p72 = scmp.eq.s32.totalorder %s13, 1
      %p73 = scmp.ne.s32.totalorder %s68, %s70
      %p74 = scmp.eq.s32.totalorder %s13, 0
      %p75 = por %p73, %p74
      %p76 = scmp.ne.s32.totalorder %s68, %s70
      %p77 = scmp.eq.s32.totalorder %s18, 1
      %p78 = por %p76, %p77
      %p79 = scmp.ne.s32.totalorder %s70, %s71
      %p80 = scmp.eq.s32.totalorder %s18, 0
      %p81 = por %p79, %p80
      %p82 = scmp.ne.s32.totalorder %s70, %s71
      %p83 = scmp.eq.s32.totalorder %s19, 1
      %p84 = por %p82, %p83
      %p86 = scmp.ne.s32.totalorder %s71, %s85
      %p87 = scmp.eq.s32.totalorder %s19, 0
      %p88 = por %p86, %p87
      %s89 = ssub.s32 %s13, %s20
      %p90 = scmp.eq.s32.totalorder %s89, 0
      %s92 = sadd.s32 %s91, 1
      %s93 = scalar_select %p90, %s91, %s92
      %p96 = pneg %p90
      %p97 = scmp.eq.s32.totalorder %s13, 1
      %p98 = por %p96, %p97
      %p99 = scmp.ne.s32.totalorder %s91, %s94
      %p100 = scmp.eq.s32.totalorder %s13, 0
      %p101 = por %p99, %p100
      %p102 = scmp.ne.s32.totalorder %s91, %s94
      %p103 = scmp.eq.s32.totalorder %s18, 1
      %p104 = por %p102, %p103
      %p105 = scmp.ne.s32.totalorder %s94, %s95
      %p106 = scmp.eq.s32.totalorder %s18, 0
      %p107 = por %p105, %p106
      %p108 = scmp.ne.s32.totalorder %s94, %s95
      %p109 = scmp.eq.s32.totalorder %s19, 1
      %p110 = por %p108, %p109
      %p112 = scmp.ne.s32.totalorder %s95, %s111
      %p113 = scmp.eq.s32.totalorder %s19, 0
      %p114 = por %p112, %p113
      %p115 = scmp.le.s32.totalorder 1, %s13
      %p116 = scmp.lt.s32.totalorder %s13, 3
      %p117 = pnand %p115, %p116
      %p118 = pneg %p117
      // Predicated region
      $region9: #{tpu_custom_call.1} parent=5 // pred_check
        _
      $region10: #{tpu_custom_call.1} parent=5 // pred_check_branch
        %120 = sbr.rel (%p117) target = $region12
      $region11: #{tpu_custom_call.1} parent=5 // pred_region
        %s121 = ssub.s32 %s13, 1
        // Predicated region
        $region13: #{tpu_custom_call.1} parent=11 // pred_check
          %p122 = pneg %p60
        $region14: #{tpu_custom_call.1} parent=11 // pred_check_branch
          %124 = sbr.rel (%p122) target = $region16
        $region15: #{tpu_custom_call.1} parent=11 // pred_region
          %s126 = ssub.s32 5504, 5504
          %127 = vsyncadd [#allocation3], %s126
          %s128 = sshll.u32 [#allocation2], 4
          %s129 = int_to_ptr.vmem [resolvable:$true] %s128
          %134 = dma.hbm_to_vmem [thread:$0]  %s1, 5504, %s129, [#allocation3], 64, 64, 4
        $region16: #{tpu_custom_call.1} parent=11 // pred_fallthru
          _
        // Predicated region
        $region17: #{tpu_custom_call.1} parent=11 // pred_check
          %p135 = pneg %p81
        $region18: #{tpu_custom_call.1} parent=11 // pred_check_branch
          %137 = sbr.rel (%p135) target = $region20
        $region19: #{tpu_custom_call.1} parent=11 // pred_region
          _
        $region20: #{tpu_custom_call.1} parent=11 // pred_fallthru
          _
      $region12: #{tpu_custom_call.1} parent=5 // pred_fallthru
        _
      %p138 = scmp.lt.s32.totalorder %s13, 2
      // Predicated region
      $region21: #{tpu_custom_call.1} parent=5 // pred_check
        %p139 = pneg %p138
      $region22: #{tpu_custom_call.1} parent=5 // pred_check_branch
        %141 = sbr.rel (%p139) target = $region24
      $region23: #{tpu_custom_call.1} parent=5 // pred_region
        // Predicated region
        $region25: #{tpu_custom_call.1} parent=23 // pred_check
          %p142 = pneg %p33
        $region26: #{tpu_custom_call.1} parent=23 // pred_check_branch
          %144 = sbr.rel (%p142) target = $region28
        $region27: #{tpu_custom_call.1} parent=23 // pred_region
          %p145 = scmp.lt.s32.totalorder %s13, 1
          %s146 = scalar_select %p145, %s13, 1
          %s147 = smul.addr %s146, 8
          %s148 = smul.addr %s147, 8
          %s149 = scalar_lea.vmem %s0, %s148
        $region28: #{tpu_custom_call.1} parent=23 // pred_fallthru
          _
      $region24: #{tpu_custom_call.1} parent=5 // pred_fallthru
        _
      %p150 = scmp.le.s32.totalorder 1, %s13
      %p151 = scmp.lt.s32.totalorder %s13, 3
      %p152 = pnand %p150, %p151
      %p153 = pneg %p152
      // Predicated region
      $region29: #{tpu_custom_call.1} parent=5 // pred_check
        _
      $region30: #{tpu_custom_call.1} parent=5 // pred_check_branch
        %155 = sbr.rel (%p152) target = $region32
      $region31: #{tpu_custom_call.1} parent=5 // pred_region
        %s156 = ssub.s32 %s13, 1
        // Predicated region
        $region33: #{tpu_custom_call.1} parent=31 // pred_check
          %p157 = pneg %p60
        $region34: #{tpu_custom_call.1} parent=31 // pred_check_branch
          %159 = sbr.rel (%p157) target = $region36
        $region35: #{tpu_custom_call.1} parent=31 // pred_region
          %160 = dma.done [#allocation3], 5504
        $region36: #{tpu_custom_call.1} parent=31 // pred_fallthru
          _
        %p161 = scmp.lt.s32.totalorder %s18, 1
        %s162 = scalar_select %p161, %s18, 1
        %s163 = smul.addr %s162, 8
        %s164 = smul.addr %s163, 8
        %s165 = scalar_lea.vmem %s0, %s164
        %p166 = pneg %p39
        %p167 = pneg %p36
        %p168 = pneg %p60
        %p169 = pneg %p57
        %p170 = pneg %p81
        %p171 = pneg %p78
        %p172 = pneg %p107
        %p173 = pneg %p104
        %s174 = sand.u32 %s94, 1
        %s175 = scalar_lea.sflag [#allocation4], %s174
        %s176 = sand.u32 %s94, 1
        %s177 = smul.addr %s176, 4
        %s178 = scalar_lea.vmem [#allocation5], %s177
        %p179 = scmp.lt.s32.totalorder %s18, 1
        %s180 = scalar_select %p179, %s18, 1
        %s181 = smul.addr %s180, 8
        %s182 = smul.addr %s181, 8
        %s183 = scalar_lea.vmem %s0, %s182
        %v185 = vld [vmem:[%s183] sm:$0xff]
        %v186 = vld [vmem:[%s183 + $0x8] sm:$0xff]
        %v187 = vld [vmem:[%s183 + $0x10] sm:$0xff]
        %v188 = vld [vmem:[%s183 + $0x18] sm:$0xff]
        %v189 = vld [vmem:[%s183 + $0x20] sm:$0xff]
        %v190 = vld [vmem:[%s183 + $0x28] sm:$0xff]
        %v191 = vld [vmem:[%s183 + $0x30] sm:$0xff]
        %v192 = vld [vmem:[%s183 + $0x38] sm:$0xff]
        %v193 = vlaneseq
        %v194 = vshrl.u32 %v193, 7
        %v195 = vadd.s32 %v194, 8
        %v196 = vadd.s32 %v194, 16
        %v197 = vadd.s32 %v194, 24
        %v198 = vadd.s32 %v194, 32
        %v199 = vadd.s32 %v194, 40
        %v200 = vadd.s32 %v194, 48
        %v201 = vadd.s32 %v194, 56
        %vm202 = vcmp.eq.s32.totalorder %v194, 0
        %vm203 = vcmp.eq.s32.totalorder %v195, 0
        %vm204 = vcmp.eq.s32.totalorder %v196, 0
        %vm205 = vcmp.eq.s32.totalorder %v197, 0
        %vm206 = vcmp.eq.s32.totalorder %v198, 0
        %vm207 = vcmp.eq.s32.totalorder %v199, 0
        %vm208 = vcmp.eq.s32.totalorder %v200, 0
        %vm209 = vcmp.eq.s32.totalorder %v201, 0
        %v210 = vrot.slane %v185, 7
        %v211 = vrot.slane %v186, 7
        %v212 = vrot.slane %v187, 7
        %v213 = vrot.slane %v188, 7
        %v214 = vrot.slane %v189, 7
        %v215 = vrot.slane %v190, 7
        %v216 = vrot.slane %v191, 7
        %v217 = vrot.slane %v192, 7
        %vm218 = vcmp.lt.s32.totalorder %v194, 1
        %v219 = vsel %vm218, %v216, %v217
        %v220 = vsel %vm218, %v215, %v216
        %v221 = vsel %vm218, %v214, %v215
        %v222 = vsel %vm218, %v213, %v214
        %v223 = vsel %vm218, %v212, %v213
        %v224 = vsel %vm218, %v211, %v212
        %v225 = vsel %vm218, %v210, %v211
        %v226 = vsel %vm218, %v217, %v210
        %v227 = vsel %vm202, 0.0, %v226
        %v228 = vsel %vm203, 0.0, %v225
        %v229 = vsel %vm204, 0.0, %v224
        %v230 = vsel %vm205, 0.0, %v223
        %v231 = vsel %vm206, 0.0, %v222
        %v232 = vsel %vm207, 0.0, %v221
        %v233 = vsel %vm208, 0.0, %v220
        %v234 = vsel %vm209, 0.0, %v219
        %vm235 = vcmp.eq.s32.totalorder %v194, 63
        %vm236 = vcmp.eq.s32.totalorder %v195, 63
        %vm237 = vcmp.eq.s32.totalorder %v196, 63
        %vm238 = vcmp.eq.s32.totalorder %v197, 63
        %vm239 = vcmp.eq.s32.totalorder %v198, 63
        %vm240 = vcmp.eq.s32.totalorder %v199, 63
        %vm241 = vcmp.eq.s32.totalorder %v200, 63
        %vm242 = vcmp.eq.s32.totalorder %v201, 63
        %v243 = vrot.slane %v185, 1
        %v244 = vrot.slane %v186, 1
        %v245 = vrot.slane %v187, 1
        %v246 = vrot.slane %v188, 1
        %v247 = vrot.slane %v189, 1
        %v248 = vrot.slane %v190, 1
        %v249 = vrot.slane %v191, 1
        %v250 = vrot.slane %v192, 1
        %vm251 = vcmp.lt.s32.totalorder %v194, 7
        %v252 = vsel %vm251, %v249, %v250
        %v253 = vsel %vm251, %v248, %v249
        %v254 = vsel %vm251, %v247, %v248
        %v255 = vsel %vm251, %v246, %v247
        %v256 = vsel %vm251, %v245, %v246
        %v257 = vsel %vm251, %v244, %v245
        %v258 = vsel %vm251, %v243, %v244
        %v259 = vsel %vm251, %v250, %v243
        %v260 = vsel %vm235, 0.0, %v258
        %v261 = vsel %vm236, 0.0, %v257
        %v262 = vsel %vm237, 0.0, %v256
        %v263 = vsel %vm238, 0.0, %v255
        %v264 = vsel %vm239, 0.0, %v254
        %v265 = vsel %vm240, 0.0, %v253
        %v266 = vsel %vm241, 0.0, %v252
        %v267 = vsel %vm242, 0.0, %v259
        %276 = vrot.lane.b32.xlu0 %v185, 4
        %v277 = vpop.permute.xlu0 %276
        %278 = vrot.lane.b32.xlu0 %v186, 4
        %v279 = vpop.permute.xlu0 %278
        %280 = vrot.lane.b32.xlu0 %v187, 4
        %v281 = vpop.permute.xlu0 %280
        %282 = vrot.lane.b32.xlu0 %v188, 4
        %v283 = vpop.permute.xlu0 %282
        %284 = vrot.lane.b32.xlu0 %v189, 4
        %v285 = vpop.permute.xlu0 %284
        %286 = vrot.lane.b32.xlu0 %v190, 4
        %v287 = vpop.permute.xlu0 %286
        %288 = vrot.lane.b32.xlu0 %v191, 4
        %v289 = vpop.permute.xlu0 %288
        %290 = vrot.lane.b32.xlu0 %v192, 4
        %v291 = vpop.permute.xlu0 %290
        %308 = vrot.lane.b32.xlu0 %v260, 8
        %v309 = vpop.permute.xlu0 %308
        %310 = vrot.lane.b32.xlu0 %v261, 8
        %v311 = vpop.permute.xlu0 %310
        %312 = vrot.lane.b32.xlu0 %v262, 8
        %v313 = vpop.permute.xlu0 %312
        %314 = vrot.lane.b32.xlu0 %v263, 8
        %v315 = vpop.permute.xlu0 %314
        %316 = vrot.lane.b32.xlu0 %v264, 8
        %v317 = vpop.permute.xlu0 %316
        %318 = vrot.lane.b32.xlu0 %v265, 8
        %v319 = vpop.permute.xlu0 %318
        %320 = vrot.lane.b32.xlu0 %v266, 8
        %v321 = vpop.permute.xlu0 %320
        %322 = vrot.lane.b32.xlu0 %v267, 8
        %v323 = vpop.permute.xlu0 %322
        %vm332 = vcmask 31744
        %v333 = vsel %vm332, %v227, %v277
        %v334 = vsel %vm332, %v228, %v279
        %v335 = vsel %vm332, %v229, %v281
        %v336 = vsel %vm332, %v230, %v283
        %v337 = vsel %vm332, %v231, %v285
        %v338 = vsel %vm332, %v232, %v287
        %v339 = vsel %vm332, %v233, %v289
        %v340 = vsel %vm332, %v234, %v291
        %vm341 = vcmask 64512
        %v342 = vsel %vm341, %v333, %v309
        %v343 = vsel %vm341, %v334, %v311
        %v344 = vsel %vm341, %v335, %v313
        %v345 = vsel %vm341, %v336, %v315
        %v346 = vsel %vm341, %v337, %v317
        %v347 = vsel %vm341, %v338, %v319
        %v348 = vsel %vm341, %v339, %v321
        %v349 = vsel %vm341, %v340, %v323
        %vm350 = vcmask 97280
        %v351 = vsel %vm350, %v342, 0.0
        %v352 = vsel %vm350, %v343, 0.0
        %v353 = vsel %vm350, %v344, 0.0
        %v354 = vsel %vm350, %v345, 0.0
        %v355 = vsel %vm350, %v346, 0.0
        %v356 = vsel %vm350, %v347, 0.0
        %v357 = vsel %vm350, %v348, 0.0
        %v358 = vsel %vm350, %v349, 0.0
        %v359 = vld [vmem:[#allocation2] sm:$0xf]
        %v360 = vld [vmem:[#allocation2 + $0x4] sm:$0xf]
        %v361 = vpack.c.bf16 %v352, %v351
        %v362 = vpack.c.bf16 %v354, %v353
        %v363 = vpack.c.bf16 %v356, %v355
        %v364 = vpack.c.bf16 %v358, %v357
        %v365 = vld [vmem:[%s2] sm:$0x1]
        %v366 = vlaneseq
        %v367 = vshrl.u32 %v366, 7
        %v368 = vsub.s32 0, %v367
        %v369 = vrot.slane %v365, %v368
        %v372 = vunpack.c.l.b16 %v359
        %v373 = vunpack.c.l.b16 %v360
        %v374 = vpack.c.b16 %v373, %v372
        %vm376 = vcmask 130048
        %v378 = vsel %vm376, %v361, 0
        %v381 = vsel %vm376, %v362, 0
        %v384 = vsel %vm376, %v363, 0
        %v387 = vsel %vm376, %v364, 0
        %389 = vmatprep.subr.bf16.mxu0 0
        %390 = vmatpush1.bf16.msra.mxu0 %v374
        %391 = vmatprep.subr.bf16.mxu0 0
        %392 = vmatpush1.bf16.msra.mxu0 0
        %393 = vmatprep.subr.bf16.mxu0 0
        %394 = vmatpush1.bf16.msra.mxu0 0
        %395 = vmatprep.subr.bf16.mxu0 0
        %396 = vmatpush1.bf16.msra.mxu0 0
        %397 = vmatprep.subr.bf16.mxu0 0
        %398 = vmatpush1.bf16.msra.mxu0 0
        %399 = vmatprep.subr.bf16.mxu0 0
        %400 = vmatpush1.bf16.msra.mxu0 0
        %401 = vmatprep.subr.bf16.mxu0 0
        %402 = vmatpush1.bf16.msra.mxu0 0
        %403 = vmatprep.subr.bf16.mxu0 0
        %404 = vmatpush1.bf16.msra.mxu0 0
        %405 = vmatprep.subr.bf16.mxu0 0
        %406 = vmatpush1.bf16.msra.mxu0 0
        %407 = vmatprep.subr.bf16.mxu0 0
        %408 = vmatpush1.bf16.msra.mxu0 0
        %409 = vmatprep.subr.bf16.mxu0 0
        %410 = vmatpush1.bf16.msra.mxu0 0
        %411 = vmatprep.subr.bf16.mxu0 0
        %412 = vmatpush1.bf16.msra.mxu0 0
        %413 = vmatprep.subr.bf16.mxu0 0
        %414 = vmatpush1.bf16.msra.mxu0 0
        %415 = vmatprep.subr.bf16.mxu0 0
        %416 = vmatpush1.bf16.msra.mxu0 0
        %417 = vmatprep.subr.bf16.mxu0 0
        %418 = vmatpush1.bf16.msra.mxu0 0
        %419 = vmatprep.subr.bf16.mxu0 0
        %420 = vmatpush1.bf16.msra.mxu0 0
        %421 = vmatprep.mubr.bf16.mxu0 0
        %422 = vmatmul.mubr.bf16.gmra.mrb[0].mxu0 %v378
        %v423 = vpop.f32.mrb[0].mxu0
        %v424 = vadd.f32 %v369, %v423
        %v425 = vpop.f32.mrb[0].mxu0
        %v426 = vpop.f32.mrb[0].mxu0
        %v427 = vadd.f32 %v369, %v426
        %v428 = vpop.f32.mrb[0].mxu0
        %429 = vmatprep.mubr.bf16.mxu0 0
        %430 = vmatmul.mubr.bf16.gmra.mrb[0].mxu0 %v381
        %v431 = vpop.f32.mrb[0].mxu0
        %v432 = vadd.f32 %v369, %v431
        %v433 = vpop.f32.mrb[0].mxu0
        %v434 = vpop.f32.mrb[0].mxu0
        %v435 = vadd.f32 %v369, %v434
        %v436 = vpop.f32.mrb[0].mxu0
        %437 = vmatprep.mubr.bf16.mxu0 0
        %438 = vmatmul.mubr.bf16.gmra.mrb[0].mxu0 %v384
        %v439 = vpop.f32.mrb[0].mxu0
        %v440 = vadd.f32 %v369, %v439
        %v441 = vpop.f32.mrb[0].mxu0
        %v442 = vpop.f32.mrb[0].mxu0
        %v443 = vadd.f32 %v369, %v442
        %v444 = vpop.f32.mrb[0].mxu0
        %445 = vmatprep.mubr.bf16.mxu0 0
        %446 = vmatmul.mubr.bf16.gmra.mrb[0].mxu0 %v387
        %v447 = vpop.f32.mrb[0].mxu0
        %v448 = vadd.f32 %v369, %v447
        %v449 = vpop.f32.mrb[0].mxu0
        %v450 = vpop.f32.mrb[0].mxu0
        %v451 = vadd.f32 %v369, %v450
        %v452 = vpop.f32.mrb[0].mxu0
        %453 = vdwg.mxu0
        %v454 = vmax.f32 %v424, 0.0
        %v455 = vmax.f32 %v427, 0.0
        %v456 = vmax.f32 %v432, 0.0
        %v457 = vmax.f32 %v435, 0.0
        %v458 = vmax.f32 %v440, 0.0
        %v459 = vmax.f32 %v443, 0.0
        %v460 = vmax.f32 %v448, 0.0
        %v461 = vmax.f32 %v451, 0.0
        %v470 = vcombine.high %v454, %v454
        %v472 = vunpack.c.l.s4 1983009808
        %v473 = vunpack.c.0.s8 %v472
        %v474 = vlaneseq
        %v475 = vshrl.u32 %v474, 7
        %v476 = vsub.s32 %v473, %v475
        %v477 = vrot.slane %v454, %v476
        %v479 = vunpack.c.l.s4 1983009808
        %v480 = vunpack.c.0.s8 %v479
        %v481 = vlaneseq
        %v482 = vshrl.u32 %v481, 7
        %v483 = vsub.s32 %v480, %v482
        %v484 = vrot.slane %v470, %v483
        %v485 = vcombine.high %v477, %v477
        %v486 = vcombine.high %v484, %v484
        %v487 = vcombine.high %v455, %v455
        %v489 = vunpack.c.l.s4 1983009808
        %v490 = vunpack.c.0.s8 %v489
        %v491 = vlaneseq
        %v492 = vshrl.u32 %v491, 7
        %v493 = vsub.s32 %v490, %v492
        %v494 = vrot.slane %v455, %v493
        %v496 = vunpack.c.l.s4 1983009808
        %v497 = vunpack.c.0.s8 %v496
        %v498 = vlaneseq
        %v499 = vshrl.u32 %v498, 7
        %v500 = vsub.s32 %v497, %v499
        %v501 = vrot.slane %v487, %v500
        %v502 = vcombine.high %v494, %v494
        %v503 = vcombine.high %v501, %v501
        %v504 = vcombine.high %v456, %v456
        %v506 = vunpack.c.l.s4 1983009808
        %v507 = vunpack.c.0.s8 %v506
        %v508 = vlaneseq
        %v509 = vshrl.u32 %v508, 7
        %v510 = vsub.s32 %v507, %v509
        %v511 = vrot.slane %v456, %v510
        %v513 = vunpack.c.l.s4 1983009808
        %v514 = vunpack.c.0.s8 %v513
        %v515 = vlaneseq
        %v516 = vshrl.u32 %v515, 7
        %v517 = vsub.s32 %v514, %v516
        %v518 = vrot.slane %v504, %v517
        %v519 = vcombine.high %v511, %v511
        %v520 = vcombine.high %v518, %v518
        %v521 = vcombine.high %v457, %v457
        %v523 = vunpack.c.l.s4 1983009808
        %v524 = vunpack.c.0.s8 %v523
        %v525 = vlaneseq
        %v526 = vshrl.u32 %v525, 7
        %v527 = vsub.s32 %v524, %v526
        %v528 = vrot.slane %v457, %v527
        %v530 = vunpack.c.l.s4 1983009808
        %v531 = vunpack.c.0.s8 %v530
        %v532 = vlaneseq
        %v533 = vshrl.u32 %v532, 7
        %v534 = vsub.s32 %v531, %v533
        %v535 = vrot.slane %v521, %v534
        %v536 = vcombine.high %v528, %v528
        %v537 = vcombine.high %v535, %v535
        %v538 = vcombine.high %v458, %v458
        %v540 = vunpack.c.l.s4 1983009808
        %v541 = vunpack.c.0.s8 %v540
        %v542 = vlaneseq
        %v543 = vshrl.u32 %v542, 7
        %v544 = vsub.s32 %v541, %v543
        %v545 = vrot.slane %v458, %v544
        %v547 = vunpack.c.l.s4 1983009808
        %v548 = vunpack.c.0.s8 %v547
        %v549 = vlaneseq
        %v550 = vshrl.u32 %v549, 7
        %v551 = vsub.s32 %v548, %v550
        %v552 = vrot.slane %v538, %v551
        %v553 = vcombine.high %v545, %v545
        %v554 = vcombine.high %v552, %v552
        %v555 = vcombine.high %v459, %v459
        %v557 = vunpack.c.l.s4 1983009808
        %v558 = vunpack.c.0.s8 %v557
        %v559 = vlaneseq
        %v560 = vshrl.u32 %v559, 7
        %v561 = vsub.s32 %v558, %v560
        %v562 = vrot.slane %v459, %v561
        %v564 = vunpack.c.l.s4 1983009808
        %v565 = vunpack.c.0.s8 %v564
        %v566 = vlaneseq
        %v567 = vshrl.u32 %v566, 7
        %v568 = vsub.s32 %v565, %v567
        %v569 = vrot.slane %v555, %v568
        %v570 = vcombine.high %v562, %v562
        %v571 = vcombine.high %v569, %v569
        %v572 = vcombine.high %v460, %v460
        %v574 = vunpack.c.l.s4 1983009808
        %v575 = vunpack.c.0.s8 %v574
        %v576 = vlaneseq
        %v577 = vshrl.u32 %v576, 7
        %v578 = vsub.s32 %v575, %v577
        %v579 = vrot.slane %v460, %v578
        %v581 = vunpack.c.l.s4 1983009808
        %v582 = vunpack.c.0.s8 %v581
        %v583 = vlaneseq
        %v584 = vshrl.u32 %v583, 7
        %v585 = vsub.s32 %v582, %v584
        %v586 = vrot.slane %v572, %v585
        %v587 = vcombine.high %v579, %v579
        %v588 = vcombine.high %v586, %v586
        %v589 = vcombine.high %v461, %v461
        %v591 = vunpack.c.l.s4 1983009808
        %v592 = vunpack.c.0.s8 %v591
        %v593 = vlaneseq
        %v594 = vshrl.u32 %v593, 7
        %v595 = vsub.s32 %v592, %v594
        %v596 = vrot.slane %v461, %v595
        %v598 = vunpack.c.l.s4 1983009808
        %v599 = vunpack.c.0.s8 %v598
        %v600 = vlaneseq
        %v601 = vshrl.u32 %v600, 7
        %v602 = vsub.s32 %v599, %v601
        %v603 = vrot.slane %v589, %v602
        %v604 = vcombine.high %v596, %v596
        %v605 = vcombine.high %v603, %v603
        %vm638 = vcmask 254976
        %v639 = vsel %vm638, %v477, -inf
        %v640 = vrot.slane %v639, 4
        %v641 = vmax.f32 %v639, %v640
        %v642 = vrot.slane %v641, 2
        %v643 = vmax.f32 %v641, %v642
        %v644 = vrot.slane %v643, 1
        %v645 = vmax.f32 %v643, %v644
        %v646 = vsel %vm638, %v485, -inf
        %v647 = vrot.slane %v646, 4
        %v648 = vmax.f32 %v646, %v647
        %v649 = vrot.slane %v648, 2
        %v650 = vmax.f32 %v648, %v649
        %v651 = vrot.slane %v650, 1
        %v652 = vmax.f32 %v650, %v651
        %v653 = vsel %vm638, %v484, -inf
        %v654 = vrot.slane %v653, 4
        %v655 = vmax.f32 %v653, %v654
        %v656 = vrot.slane %v655, 2
        %v657 = vmax.f32 %v655, %v656
        %v658 = vrot.slane %v657, 1
        %v659 = vmax.f32 %v657, %v658
        %v660 = vsel %vm638, %v486, -inf
        %v661 = vrot.slane %v660, 4
        %v662 = vmax.f32 %v660, %v661
        %v663 = vrot.slane %v662, 2
        %v664 = vmax.f32 %v662, %v663
        %v665 = vrot.slane %v664, 1
        %v666 = vmax.f32 %v664, %v665
        %v667 = vsel %vm638, %v494, -inf
        %v668 = vrot.slane %v667, 4
        %v669 = vmax.f32 %v667, %v668
        %v670 = vrot.slane %v669, 2
        %v671 = vmax.f32 %v669, %v670
        %v672 = vrot.slane %v671, 1
        %v673 = vmax.f32 %v671, %v672
        %v674 = vsel %vm638, %v502, -inf
        %v675 = vrot.slane %v674, 4
        %v676 = vmax.f32 %v674, %v675
        %v677 = vrot.slane %v676, 2
        %v678 = vmax.f32 %v676, %v677
        %v679 = vrot.slane %v678, 1
        %v680 = vmax.f32 %v678, %v679
        %v681 = vsel %vm638, %v501, -inf
        %v682 = vrot.slane %v681, 4
        %v683 = vmax.f32 %v681, %v682
        %v684 = vrot.slane %v683, 2
        %v685 = vmax.f32 %v683, %v684
        %v686 = vrot.slane %v685, 1
        %v687 = vmax.f32 %v685, %v686
        %v688 = vsel %vm638, %v503, -inf
        %v689 = vrot.slane %v688, 4
        %v690 = vmax.f32 %v688, %v689
        %v691 = vrot.slane %v690, 2
        %v692 = vmax.f32 %v690, %v691
        %v693 = vrot.slane %v692, 1
        %v694 = vmax.f32 %v692, %v693
        %v695 = vsel %vm638, %v511, -inf
        %v696 = vrot.slane %v695, 4
        %v697 = vmax.f32 %v695, %v696
        %v698 = vrot.slane %v697, 2
        %v699 = vmax.f32 %v697, %v698
        %v700 = vrot.slane %v699, 1
        %v701 = vmax.f32 %v699, %v700
        %v702 = vsel %vm638, %v519, -inf
        %v703 = vrot.slane %v702, 4
        %v704 = vmax.f32 %v702, %v703
        %v705 = vrot.slane %v704, 2
        %v706 = vmax.f32 %v704, %v705
        %v707 = vrot.slane %v706, 1
        %v708 = vmax.f32 %v706, %v707
        %v709 = vsel %vm638, %v518, -inf
        %v710 = vrot.slane %v709, 4
        %v711 = vmax.f32 %v709, %v710
        %v712 = vrot.slane %v711, 2
        %v713 = vmax.f32 %v711, %v712
        %v714 = vrot.slane %v713, 1
        %v715 = vmax.f32 %v713, %v714
        %v716 = vsel %vm638, %v520, -inf
        %v717 = vrot.slane %v716, 4
        %v718 = vmax.f32 %v716, %v717
        %v719 = vrot.slane %v718, 2
        %v720 = vmax.f32 %v718, %v719
        %v721 = vrot.slane %v720, 1
        %v722 = vmax.f32 %v720, %v721
        %v723 = vsel %vm638, %v528, -inf
        %v724 = vrot.slane %v723, 4
        %v725 = vmax.f32 %v723, %v724
        %v726 = vrot.slane %v725, 2
        %v727 = vmax.f32 %v725, %v726
        %v728 = vrot.slane %v727, 1
        %v729 = vmax.f32 %v727, %v728
        %v730 = vsel %vm638, %v536, -inf
        %v731 = vrot.slane %v730, 4
        %v732 = vmax.f32 %v730, %v731
        %v733 = vrot.slane %v732, 2
        %v734 = vmax.f32 %v732, %v733
        %v735 = vrot.slane %v734, 1
        %v736 = vmax.f32 %v734, %v735
        %v737 = vsel %vm638, %v535, -inf
        %v738 = vrot.slane %v737, 4
        %v739 = vmax.f32 %v737, %v738
        %v740 = vrot.slane %v739, 2
        %v741 = vmax.f32 %v739, %v740
        %v742 = vrot.slane %v741, 1
        %v743 = vmax.f32 %v741, %v742
        %v744 = vsel %vm638, %v537, -inf
        %v745 = vrot.slane %v744, 4
        %v746 = vmax.f32 %v744, %v745
        %v747 = vrot.slane %v746, 2
        %v748 = vmax.f32 %v746, %v747
        %v749 = vrot.slane %v748, 1
        %v750 = vmax.f32 %v748, %v749
        %v751 = vsel %vm638, %v545, -inf
        %v752 = vrot.slane %v751, 4
        %v753 = vmax.f32 %v751, %v752
        %v754 = vrot.slane %v753, 2
        %v755 = vmax.f32 %v753, %v754
        %v756 = vrot.slane %v755, 1
        %v757 = vmax.f32 %v755, %v756
        %v758 = vsel %vm638, %v553, -inf
        %v759 = vrot.slane %v758, 4
        %v760 = vmax.f32 %v758, %v759
        %v761 = vrot.slane %v760, 2
        %v762 = vmax.f32 %v760, %v761
        %v763 = vrot.slane %v762, 1
        %v764 = vmax.f32 %v762, %v763
        %v765 = vsel %vm638, %v552, -inf
        %v766 = vrot.slane %v765, 4
        %v767 = vmax.f32 %v765, %v766
        %v768 = vrot.slane %v767, 2
        %v769 = vmax.f32 %v767, %v768
        %v770 = vrot.slane %v769, 1
        %v771 = vmax.f32 %v769, %v770
        %v772 = vsel %vm638, %v554, -inf
        %v773 = vrot.slane %v772, 4
        %v774 = vmax.f32 %v772, %v773
        %v775 = vrot.slane %v774, 2
        %v776 = vmax.f32 %v774, %v775
        %v777 = vrot.slane %v776, 1
        %v778 = vmax.f32 %v776, %v777
        %v779 = vsel %vm638, %v562, -inf
        %v780 = vrot.slane %v779, 4
        %v781 = vmax.f32 %v779, %v780
        %v782 = vrot.slane %v781, 2
        %v783 = vmax.f32 %v781, %v782
        %v784 = vrot.slane %v783, 1
        %v785 = vmax.f32 %v783, %v784
        %v786 = vsel %vm638, %v570, -inf
        %v787 = vrot.slane %v786, 4
        %v788 = vmax.f32 %v786, %v787
        %v789 = vrot.slane %v788, 2
        %v790 = vmax.f32 %v788, %v789
        %v791 = vrot.slane %v790, 1
        %v792 = vmax.f32 %v790, %v791
        %v793 = vsel %vm638, %v569, -inf
        %v794 = vrot.slane %v793, 4
        %v795 = vmax.f32 %v793, %v794
        %v796 = vrot.slane %v795, 2
        %v797 = vmax.f32 %v795, %v796
        %v798 = vrot.slane %v797, 1
        %v799 = vmax.f32 %v797, %v798
        %v800 = vsel %vm638, %v571, -inf
        %v801 = vrot.slane %v800, 4
        %v802 = vmax.f32 %v800, %v801
        %v803 = vrot.slane %v802, 2
        %v804 = vmax.f32 %v802, %v803
        %v805 = vrot.slane %v804, 1
        %v806 = vmax.f32 %v804, %v805
        %v807 = vsel %vm638, %v579, -inf
        %v808 = vrot.slane %v807, 4
        %v809 = vmax.f32 %v807, %v808
        %v810 = vrot.slane %v809, 2
        %v811 = vmax.f32 %v809, %v810
        %v812 = vrot.slane %v811, 1
        %v813 = vmax.f32 %v811, %v812
        %v814 = vsel %vm638, %v587, -inf
        %v815 = vrot.slane %v814, 4
        %v816 = vmax.f32 %v814, %v815
        %v817 = vrot.slane %v816, 2
        %v818 = vmax.f32 %v816, %v817
        %v819 = vrot.slane %v818, 1
        %v820 = vmax.f32 %v818, %v819
        %v821 = vsel %vm638, %v586, -inf
        %v822 = vrot.slane %v821, 4
        %v823 = vmax.f32 %v821, %v822
        %v824 = vrot.slane %v823, 2
        %v825 = vmax.f32 %v823, %v824
        %v826 = vrot.slane %v825, 1
        %v827 = vmax.f32 %v825, %v826
        %v828 = vsel %vm638, %v588, -inf
        %v829 = vrot.slane %v828, 4
        %v830 = vmax.f32 %v828, %v829
        %v831 = vrot.slane %v830, 2
        %v832 = vmax.f32 %v830, %v831
        %v833 = vrot.slane %v832, 1
        %v834 = vmax.f32 %v832, %v833
        %v835 = vsel %vm638, %v596, -inf
        %v836 = vrot.slane %v835, 4
        %v837 = vmax.f32 %v835, %v836
        %v838 = vrot.slane %v837, 2
        %v839 = vmax.f32 %v837, %v838
        %v840 = vrot.slane %v839, 1
        %v841 = vmax.f32 %v839, %v840
        %v842 = vsel %vm638, %v604, -inf
        %v843 = vrot.slane %v842, 4
        %v844 = vmax.f32 %v842, %v843
        %v845 = vrot.slane %v844, 2
        %v846 = vmax.f32 %v844, %v845
        %v847 = vrot.slane %v846, 1
        %v848 = vmax.f32 %v846, %v847
        %v849 = vsel %vm638, %v603, -inf
        %v850 = vrot.slane %v849, 4
        %v851 = vmax.f32 %v849, %v850
        %v852 = vrot.slane %v851, 2
        %v853 = vmax.f32 %v851, %v852
        %v854 = vrot.slane %v853, 1
        %v855 = vmax.f32 %v853, %v854
        %v856 = vsel %vm638, %v605, -inf
        %v857 = vrot.slane %v856, 4
        %v858 = vmax.f32 %v856, %v857
        %v859 = vrot.slane %v858, 2
        %v860 = vmax.f32 %v858, %v859
        %v861 = vrot.slane %v860, 1
        %v862 = vmax.f32 %v860, %v861
        %vm895 = vcmask 1041409
        %v896 = vsel %vm895, %v652, %v645
        %vm897 = vcmask 1042434
        %v898 = vsel %vm897, %v659, %v896
        %vm899 = vcmask 1043459
        %v900 = vsel %vm899, %v666, %v898
        %vm901 = vcmask 1044484
        %v902 = vsel %vm901, %v673, %v900
        %vm903 = vcmask 1045509
        %v904 = vsel %vm903, %v680, %v902
        %vm905 = vcmask 1046534
        %v906 = vsel %vm905, %v687, %v904
        %vm907 = vcmask 1047559
        %v908 = vsel %vm907, %v694, %v906
        %v909 = vsel %vm895, %v708, %v701
        %v910 = vsel %vm897, %v715, %v909
        %v911 = vsel %vm899, %v722, %v910
        %v912 = vsel %vm901, %v729, %v911
        %v913 = vsel %vm903, %v736, %v912
        %v914 = vsel %vm905, %v743, %v913
        %v915 = vsel %vm907, %v750, %v914
        %v916 = vsel %vm895, %v764, %v757
        %v917 = vsel %vm897, %v771, %v916
        %v918 = vsel %vm899, %v778, %v917
        %v919 = vsel %vm901, %v785, %v918
        %v920 = vsel %vm903, %v792, %v919
        %v921 = vsel %vm905, %v799, %v920
        %v922 = vsel %vm907, %v806, %v921
        %v923 = vsel %vm895, %v820, %v813
        %v924 = vsel %vm897, %v827, %v923
        %v925 = vsel %vm899, %v834, %v924
        %v926 = vsel %vm901, %v841, %v925
        %v927 = vsel %vm903, %v848, %v926
        %v928 = vsel %vm905, %v855, %v927
        %v929 = vsel %vm907, %v862, %v928
        %v934 = vrot.slane %v908, 7
        %v935 = vrot.slane %v915, 7
        %v936 = vrot.slane %v922, 7
        %v937 = vrot.slane %v929, 7
        %v938 = vsel %vm218, %v936, %v937
        %v939 = vsel %vm218, %v935, %v936
        %v940 = vsel %vm218, %v934, %v935
        %v941 = vsel %vm218, %v937, %v934
        %v942 = vsel %vm202, 0.0, %v941
        %v943 = vsel %vm203, 0.0, %v940
        %v944 = vsel %vm204, 0.0, %v939
        %v945 = vsel %vm205, 0.0, %v938
        %vm946 = vcmp.eq.s32.totalorder %v194, 31
        %vm947 = vcmp.eq.s32.totalorder %v195, 31
        %vm948 = vcmp.eq.s32.totalorder %v196, 31
        %vm949 = vcmp.eq.s32.totalorder %v197, 31
        %v950 = vrot.slane %v908, 1
        %v951 = vrot.slane %v915, 1
        %v952 = vrot.slane %v922, 1
        %v953 = vrot.slane %v929, 1
        %v954 = vsel %vm251, %v952, %v953
        %v955 = vsel %vm251, %v951, %v952
        %v956 = vsel %vm251, %v950, %v951
        %v957 = vsel %vm251, %v953, %v950
        %v958 = vsel %vm946, 0.0, %v956
        %v959 = vsel %vm947, 0.0, %v955
        %v960 = vsel %vm948, 0.0, %v954
        %v961 = vsel %vm949, 0.0, %v957
        %962 = vrot.lane.b32.xlu0 %v908, 32
        %v963 = vpop.permute.xlu0 %962
        %964 = vrot.lane.b32.xlu0 %v915, 32
        %v965 = vpop.permute.xlu0 %964
        %966 = vrot.lane.b32.xlu0 %v922, 32
        %v967 = vpop.permute.xlu0 %966
        %968 = vrot.lane.b32.xlu0 %v929, 32
        %v969 = vpop.permute.xlu0 %968
        %978 = vrot.lane.b32.xlu0 %v958, 64
        %v979 = vpop.permute.xlu0 %978
        %980 = vrot.lane.b32.xlu0 %v959, 64
        %v981 = vpop.permute.xlu0 %980
        %982 = vrot.lane.b32.xlu0 %v960, 64
        %v983 = vpop.permute.xlu0 %982
        %984 = vrot.lane.b32.xlu0 %v961, 64
        %v985 = vpop.permute.xlu0 %984
        %vm990 = vcmask 261120
        %v991 = vsel %vm990, %v942, %v963
        %v992 = vsel %vm990, %v943, %v965
        %v993 = vsel %vm990, %v944, %v967
        %v994 = vsel %vm990, %v945, %v969
        %vm995 = vcmask 523264
        %v996 = vsel %vm995, %v991, %v979
        %v997 = vsel %vm995, %v992, %v981
        %v998 = vsel %vm995, %v993, %v983
        %v999 = vsel %vm995, %v994, %v985
        %v1000 = vld [vmem:[#allocation2 + $0x8] sm:$0xf]
        %v1001 = vld [vmem:[#allocation2 + $0xc] sm:$0xf]
        %v1002 = vld [vmem:[#allocation2 + $0x10] sm:$0xf]
        %v1003 = vld [vmem:[#allocation2 + $0x14] sm:$0xf]
        %v1004 = vld [vmem:[#allocation2 + $0x18] sm:$0xf]
        %v1005 = vld [vmem:[#allocation2 + $0x1c] sm:$0xf]
        %v1006 = vld [vmem:[#allocation2 + $0x20] sm:$0xf]
        %v1007 = vld [vmem:[#allocation2 + $0x24] sm:$0xf]
        %v1008 = vld [vmem:[#allocation2 + $0x28] sm:$0xf]
        %v1009 = vld [vmem:[#allocation2 + $0x2c] sm:$0xf]
        %v1010 = vld [vmem:[#allocation2 + $0x30] sm:$0xf]
        %v1011 = vld [vmem:[#allocation2 + $0x34] sm:$0xf]
        %v1012 = vpack.c.bf16 %v997, %v996
        %v1013 = vpack.c.bf16 %v999, %v998
        %v1014 = vld [vmem:[%s2 + $0x1] sm:$0x1]
        %v1015 = vlaneseq
        %v1016 = vshrl.u32 %v1015, 7
        %v1017 = vsub.s32 0, %v1016
        %v1018 = vrot.slane %v1014, %v1017
        %v1031 = vunpack.c.l.b16 %v1000
        %v1032 = vunpack.c.l.b16 %v1001
        %v1033 = vunpack.c.l.b16 %v1002
        %v1034 = vunpack.c.l.b16 %v1003
        %v1035 = vunpack.c.l.b16 %v1004
        %v1036 = vunpack.c.l.b16 %v1005
        %v1037 = vunpack.c.l.b16 %v1006
        %v1038 = vunpack.c.l.b16 %v1007
        %v1039 = vunpack.c.l.b16 %v1008
        %v1040 = vunpack.c.l.b16 %v1009
        %v1041 = vunpack.c.l.b16 %v1010
        %v1042 = vunpack.c.l.b16 %v1011
        %v1043 = vpack.c.b16 %v1032, %v1031
        %v1044 = vpack.c.b16 %v1034, %v1033
        %v1045 = vpack.c.b16 %v1036, %v1035
        %v1046 = vpack.c.b16 %v1038, %v1037
        %v1047 = vpack.c.b16 %v1040, %v1039
        %v1048 = vpack.c.b16 %v1042, %v1041
        %vm1055 = vcmask 785408
        %v1057 = vsel %vm1055, %v1012, 0
        %v1060 = vsel %vm1055, %v1013, 0
        %1062 = vmatprep.subr.bf16.mxu0 0
        %1063 = vmatpush1.bf16.msra.mxu0 %v1043
        %1064 = vmatprep.subr.bf16.mxu0 0
        %1065 = vmatpush1.bf16.msra.mxu0 %v1044
        %1066 = vmatprep.subr.bf16.mxu0 0
        %1067 = vmatpush1.bf16.msra.mxu0 %v1045
        %1068 = vmatprep.subr.bf16.mxu0 0
        %1069 = vmatpush1.bf16.msra.mxu0 %v1046
        %1070 = vmatprep.subr.bf16.mxu0 0
        %1071 = vmatpush1.bf16.msra.mxu0 %v1047
        %1072 = vmatprep.subr.bf16.mxu0 0
        %1073 = vmatpush1.bf16.msra.mxu0 %v1048
        %1074 = vmatprep.subr.bf16.mxu0 0
        %1075 = vmatpush1.bf16.msra.mxu0 0
        %1076 = vmatprep.subr.bf16.mxu0 0
        %1077 = vmatpush1.bf16.msra.mxu0 0
        %1078 = vmatprep.subr.bf16.mxu0 0
        %1079 = vmatpush1.bf16.msra.mxu0 0
        %1080 = vmatprep.subr.bf16.mxu0 0
        %1081 = vmatpush1.bf16.msra.mxu0 0
        %1082 = vmatprep.subr.bf16.mxu0 0
        %1083 = vmatpush1.bf16.msra.mxu0 0
        %1084 = vmatprep.subr.bf16.mxu0 0
        %1085 = vmatpush1.bf16.msra.mxu0 0
        %1086 = vmatprep.subr.bf16.mxu0 0
        %1087 = vmatpush1.bf16.msra.mxu0 0
        %1088 = vmatprep.subr.bf16.mxu0 0
        %1089 = vmatpush1.bf16.msra.mxu0 0
        %1090 = vmatprep.subr.bf16.mxu0 0
        %1091 = vmatpush1.bf16.msra.mxu0 0
        %1092 = vmatprep.subr.bf16.mxu0 0
        %1093 = vmatpush1.bf16.msra.mxu0 0
        %1094 = vmatprep.mubr.bf16.mxu0 0
        %1095 = vmatmul.mubr.bf16.gmra.mrb[0].mxu0 %v1057
        %v1096 = vpop.f32.mrb[0].mxu0
        %v1097 = vadd.f32 %v1018, %v1096
        %v1098 = vpop.f32.mrb[0].mxu0
        %v1099 = vpop.f32.mrb[0].mxu0
        %v1100 = vadd.f32 %v1018, %v1099
        %v1101 = vpop.f32.mrb[0].mxu0
        %1102 = vmatprep.mubr.bf16.mxu0 0
        %1103 = vmatmul.mubr.bf16.gmra.mrb[0].mxu0 %v1060
        %v1104 = vpop.f32.mrb[0].mxu0
        %v1105 = vadd.f32 %v1018, %v1104
        %v1106 = vpop.f32.mrb[0].mxu0
        %v1107 = vpop.f32.mrb[0].mxu0
        %v1108 = vadd.f32 %v1018, %v1107
        %v1109 = vpop.f32.mrb[0].mxu0
        %1110 = vdwg.mxu0
        %v1111 = vmax.f32 %v1097, 0.0
        %v1112 = vmax.f32 %v1100, 0.0
        %v1113 = vmax.f32 %v1105, 0.0
        %v1114 = vmax.f32 %v1108, 0.0
        %v1119 = vcombine.high %v1111, %v1111
        %v1121 = vunpack.c.l.s4 1983009808
        %v1122 = vunpack.c.0.s8 %v1121
        %v1123 = vlaneseq
        %v1124 = vshrl.u32 %v1123, 7
        %v1125 = vsub.s32 %v1122, %v1124
        %v1126 = vrot.slane %v1111, %v1125
        %v1128 = vunpack.c.l.s4 1983009808
        %v1129 = vunpack.c.0.s8 %v1128
        %v1130 = vlaneseq
        %v1131 = vshrl.u32 %v1130, 7
        %v1132 = vsub.s32 %v1129, %v1131
        %v1133 = vrot.slane %v1119, %v1132
        %v1134 = vcombine.high %v1126, %v1126
        %v1135 = vcombine.high %v1133, %v1133
        %v1136 = vcombine.high %v1112, %v1112
        %v1138 = vunpack.c.l.s4 1983009808
        %v1139 = vunpack.c.0.s8 %v1138
        %v1140 = vlaneseq
        %v1141 = vshrl.u32 %v1140, 7
        %v1142 = vsub.s32 %v1139, %v1141
        %v1143 = vrot.slane %v1112, %v1142
        %v1145 = vunpack.c.l.s4 1983009808
        %v1146 = vunpack.c.0.s8 %v1145
        %v1147 = vlaneseq
        %v1148 = vshrl.u32 %v1147, 7
        %v1149 = vsub.s32 %v1146, %v1148
        %v1150 = vrot.slane %v1136, %v1149
        %v1151 = vcombine.high %v1143, %v1143
        %v1152 = vcombine.high %v1150, %v1150
        %v1153 = vcombine.high %v1113, %v1113
        %v1155 = vunpack.c.l.s4 1983009808
        %v1156 = vunpack.c.0.s8 %v1155
        %v1157 = vlaneseq
        %v1158 = vshrl.u32 %v1157, 7
        %v1159 = vsub.s32 %v1156, %v1158
        %v1160 = vrot.slane %v1113, %v1159
        %v1162 = vunpack.c.l.s4 1983009808
        %v1163 = vunpack.c.0.s8 %v1162
        %v1164 = vlaneseq
        %v1165 = vshrl.u32 %v1164, 7
        %v1166 = vsub.s32 %v1163, %v1165
        %v1167 = vrot.slane %v1153, %v1166
        %v1168 = vcombine.high %v1160, %v1160
        %v1169 = vcombine.high %v1167, %v1167
        %v1170 = vcombine.high %v1114, %v1114
        %v1172 = vunpack.c.l.s4 1983009808
        %v1173 = vunpack.c.0.s8 %v1172
        %v1174 = vlaneseq
        %v1175 = vshrl.u32 %v1174, 7
        %v1176 = vsub.s32 %v1173, %v1175
        %v1177 = vrot.slane %v1114, %v1176
        %v1179 = vunpack.c.l.s4 1983009808
        %v1180 = vunpack.c.0.s8 %v1179
        %v1181 = vlaneseq
        %v1182 = vshrl.u32 %v1181, 7
        %v1183 = vsub.s32 %v1180, %v1182
        %v1184 = vrot.slane %v1170, %v1183
        %v1185 = vcombine.high %v1177, %v1177
        %v1186 = vcombine.high %v1184, %v1184
        %vm1203 = vcmask 517120
        %v1204 = vsel %vm1203, %v1126, -inf
        %v1205 = vrot.slane %v1204, 4
        %v1206 = vmax.f32 %v1204, %v1205
        %v1207 = vrot.slane %v1206, 2
        %v1208 = vmax.f32 %v1206, %v1207
        %v1209 = vrot.slane %v1208, 1
        %v1210 = vmax.f32 %v1208, %v1209
        %v1211 = vsel %vm1203, %v1134, -inf
        %v1212 = vrot.slane %v1211, 4
        %v1213 = vmax.f32 %v1211, %v1212
        %v1214 = vrot.slane %v1213, 2
        %v1215 = vmax.f32 %v1213, %v1214
        %v1216 = vrot.slane %v1215, 1
        %v1217 = vmax.f32 %v1215, %v1216
        %v1218 = vsel %vm1203, %v1133, -inf
        %v1219 = vrot.slane %v1218, 4
        %v1220 = vmax.f32 %v1218, %v1219
        %v1221 = vrot.slane %v1220, 2
        %v1222 = vmax.f32 %v1220, %v1221
        %v1223 = vrot.slane %v1222, 1
        %v1224 = vmax.f32 %v1222, %v1223
        %v1225 = vsel %vm1203, %v1135, -inf
        %v1226 = vrot.slane %v1225, 4
        %v1227 = vmax.f32 %v1225, %v1226
        %v1228 = vrot.slane %v1227, 2
        %v1229 = vmax.f32 %v1227, %v1228
        %v1230 = vrot.slane %v1229, 1
        %v1231 = vmax.f32 %v1229, %v1230
        %v1232 = vsel %vm1203, %v1143, -inf
        %v1233 = vrot.slane %v1232, 4
        %v1234 = vmax.f32 %v1232, %v1233
        %v1235 = vrot.slane %v1234, 2
        %v1236 = vmax.f32 %v1234, %v1235
        %v1237 = vrot.slane %v1236, 1
        %v1238 = vmax.f32 %v1236, %v1237
        %v1239 = vsel %vm1203, %v1151, -inf
        %v1240 = vrot.slane %v1239, 4
        %v1241 = vmax.f32 %v1239, %v1240
        %v1242 = vrot.slane %v1241, 2
        %v1243 = vmax.f32 %v1241, %v1242
        %v1244 = vrot.slane %v1243, 1
        %v1245 = vmax.f32 %v1243, %v1244
        %v1246 = vsel %vm1203, %v1150, -inf
        %v1247 = vrot.slane %v1246, 4
        %v1248 = vmax.f32 %v1246, %v1247
        %v1249 = vrot.slane %v1248, 2
        %v1250 = vmax.f32 %v1248, %v1249
        %v1251 = vrot.slane %v1250, 1
        %v1252 = vmax.f32 %v1250, %v1251
        %v1253 = vsel %vm1203, %v1152, -inf
        %v1254 = vrot.slane %v1253, 4
        %v1255 = vmax.f32 %v1253, %v1254
        %v1256 = vrot.slane %v1255, 2
        %v1257 = vmax.f32 %v1255, %v1256
        %v1258 = vrot.slane %v1257, 1
        %v1259 = vmax.f32 %v1257, %v1258
        %v1260 = vsel %vm1203, %v1160, -inf
        %v1261 = vrot.slane %v1260, 4
        %v1262 = vmax.f32 %v1260, %v1261
        %v1263 = vrot.slane %v1262, 2
        %v1264 = vmax.f32 %v1262, %v1263
        %v1265 = vrot.slane %v1264, 1
        %v1266 = vmax.f32 %v1264, %v1265
        %v1267 = vsel %vm1203, %v1168, -inf
        %v1268 = vrot.slane %v1267, 4
        %v1269 = vmax.f32 %v1267, %v1268
        %v1270 = vrot.slane %v1269, 2
        %v1271 = vmax.f32 %v1269, %v1270
        %v1272 = vrot.slane %v1271, 1
        %v1273 = vmax.f32 %v1271, %v1272
        %v1274 = vsel %vm1203, %v1167, -inf
        %v1275 = vrot.slane %v1274, 4
        %v1276 = vmax.f32 %v1274, %v1275
        %v1277 = vrot.slane %v1276, 2
        %v1278 = vmax.f32 %v1276, %v1277
        %v1279 = vrot.slane %v1278, 1
        %v1280 = vmax.f32 %v1278, %v1279
        %v1281 = vsel %vm1203, %v1169, -inf
        %v1282 = vrot.slane %v1281, 4
        %v1283 = vmax.f32 %v1281, %v1282
        %v1284 = vrot.slane %v1283, 2
        %v1285 = vmax.f32 %v1283, %v1284
        %v1286 = vrot.slane %v1285, 1
        %v1287 = vmax.f32 %v1285, %v1286
        %v1288 = vsel %vm1203, %v1177, -inf
        %v1289 = vrot.slane %v1288, 4
        %v1290 = vmax.f32 %v1288, %v1289
        %v1291 = vrot.slane %v1290, 2
        %v1292 = vmax.f32 %v1290, %v1291
        %v1293 = vrot.slane %v1292, 1
        %v1294 = vmax.f32 %v1292, %v1293
        %v1295 = vsel %vm1203, %v1185, -inf
        %v1296 = vrot.slane %v1295, 4
        %v1297 = vmax.f32 %v1295, %v1296
        %v1298 = vrot.slane %v1297, 2
        %v1299 = vmax.f32 %v1297, %v1298
        %v1300 = vrot.slane %v1299, 1
        %v1301 = vmax.f32 %v1299, %v1300
        %v1302 = vsel %vm1203, %v1184, -inf
        %v1303 = vrot.slane %v1302, 4
        %v1304 = vmax.f32 %v1302, %v1303
        %v1305 = vrot.slane %v1304, 2
        %v1306 = vmax.f32 %v1304, %v1305
        %v1307 = vrot.slane %v1306, 1
        %v1308 = vmax.f32 %v1306, %v1307
        %v1309 = vsel %vm1203, %v1186, -inf
        %v1310 = vrot.slane %v1309, 4
        %v1311 = vmax.f32 %v1309, %v1310
        %v1312 = vrot.slane %v1311, 2
        %v1313 = vmax.f32 %v1311, %v1312
        %v1314 = vrot.slane %v1313, 1
        %v1315 = vmax.f32 %v1313, %v1314
        %v1332 = vsel %vm895, %v1217, %v1210
        %v1333 = vsel %vm897, %v1224, %v1332
        %v1334 = vsel %vm899, %v1231, %v1333
        %v1335 = vsel %vm901, %v1238, %v1334
        %v1336 = vsel %vm903, %v1245, %v1335
        %v1337 = vsel %vm905, %v1252, %v1336
        %v1338 = vsel %vm907, %v1259, %v1337
        %v1339 = vsel %vm895, %v1273, %v1266
        %v1340 = vsel %vm897, %v1280, %v1339
        %v1341 = vsel %vm899, %v1287, %v1340
        %v1342 = vsel %vm901, %v1294, %v1341
        %v1343 = vsel %vm903, %v1301, %v1342
        %v1344 = vsel %vm905, %v1308, %v1343
        %v1345 = vsel %vm907, %v1315, %v1344
        %v1348 = vrot.slane %v1338, 7
        %v1349 = vrot.slane %v1345, 7
        %v1350 = vsel %vm218, %v1348, %v1349
        %v1351 = vsel %vm218, %v1349, %v1348
        %v1352 = vsel %vm202, 0.0, %v1351
        %v1353 = vsel %vm203, 0.0, %v1350
        %vm1354 = vcmp.eq.s32.totalorder %v194, 15
        %vm1355 = vcmp.eq.s32.totalorder %v195, 15
        %v1356 = vrot.slane %v1338, 1
        %v1357 = vrot.slane %v1345, 1
        %v1358 = vsel %vm251, %v1356, %v1357
        %v1359 = vsel %vm251, %v1357, %v1356
        %v1360 = vsel %vm1354, 0.0, %v1358
        %v1361 = vsel %vm1355, 0.0, %v1359
        %1362 = vrot.lane.b32.xlu0 %v1338, 64
        %v1363 = vpop.permute.xlu0 %1362
        %1364 = vrot.lane.b32.xlu0 %v1345, 64
        %v1365 = vpop.permute.xlu0 %1364
        %v1368 = vsel %vm995, %v1352, %v1363
        %v1369 = vsel %vm995, %v1353, %v1365
        %v1370 = vld [vmem:[#allocation2 + $0x38] sm:$0xf]
        %v1371 = vld [vmem:[#allocation2 + $0x3c] sm:$0xf]
        %v1372 = vld [vmem:[#allocation2 + $0x40] sm:$0xf]
        %v1373 = vld [vmem:[#allocation2 + $0x44] sm:$0xf]
        %v1374 = vld [vmem:[#allocation2 + $0x48] sm:$0xf]
        %v1375 = vld [vmem:[#allocation2 + $0x4c] sm:$0xf]
        %v1376 = vld [vmem:[#allocation2 + $0x50] sm:$0xf]
        %v1377 = vld [vmem:[#allocation2 + $0x54] sm:$0xf]
        %v1378 = vld [vmem:[#allocation2 + $0x58] sm:$0xf]
        %v1379 = vld [vmem:[#allocation2 + $0x5c] sm:$0xf]
        %v1380 = vld [vmem:[#allocation2 + $0x60] sm:$0xf]
        %v1381 = vld [vmem:[#allocation2 + $0x64] sm:$0xf]
        %v1382 = vld [vmem:[#allocation2 + $0x68] sm:$0xf]
        %v1383 = vld [vmem:[#allocation2 + $0x6c] sm:$0xf]
        %v1384 = vld [vmem:[#allocation2 + $0x70] sm:$0xf]
        %v1385 = vld [vmem:[#allocation2 + $0x74] sm:$0xf]
        %v1386 = vld [vmem:[#allocation2 + $0x78] sm:$0xf]
        %v1387 = vld [vmem:[#allocation2 + $0x7c] sm:$0xf]
        %v1388 = vld [vmem:[#allocation2 + $0x80] sm:$0xf]
        %v1389 = vld [vmem:[#allocation2 + $0x84] sm:$0xf]
        %v1390 = vld [vmem:[#allocation2 + $0x88] sm:$0xf]
        %v1391 = vld [vmem:[#allocation2 + $0x8c] sm:$0xf]
        %v1392 = vld [vmem:[#allocation2 + $0x90] sm:$0xf]
        %v1393 = vld [vmem:[#allocation2 + $0x94] sm:$0xf]
        %v1394 = vpack.c.bf16 %v1369, %v1368
        %v1395 = vpack.c.bf16 %v1361, %v1360
        %v1396 = vld [vmem:[%s2 + $0x2] sm:$0x1]
        %v1397 = vlaneseq
        %v1398 = vshrl.u32 %v1397, 7
        %v1399 = vsub.s32 0, %v1398
        %v1400 = vrot.slane %v1396, %v1399
        %v1425 = vunpack.c.l.b16 %v1370
        %v1426 = vunpack.c.l.b16 %v1371
        %v1427 = vunpack.c.l.b16 %v1372
        %v1428 = vunpack.c.l.b16 %v1373
        %v1429 = vunpack.c.l.b16 %v1374
        %v1430 = vunpack.c.l.b16 %v1375
        %v1431 = vunpack.c.l.b16 %v1376
        %v1432 = vunpack.c.l.b16 %v1377
        %v1433 = vunpack.c.l.b16 %v1378
        %v1434 = vunpack.c.l.b16 %v1379
        %v1435 = vunpack.c.l.b16 %v1380
        %v1436 = vunpack.c.l.b16 %v1381
        %v1437 = vunpack.c.l.b16 %v1382
        %v1438 = vunpack.c.l.b16 %v1383
        %v1439 = vunpack.c.l.b16 %v1384
        %v1440 = vunpack.c.l.b16 %v1385
        %v1441 = vunpack.c.l.b16 %v1386
        %v1442 = vunpack.c.l.b16 %v1387
        %v1443 = vunpack.c.l.b16 %v1388
        %v1444 = vunpack.c.l.b16 %v1389
        %v1445 = vunpack.c.l.b16 %v1390
        %v1446 = vunpack.c.l.b16 %v1391
        %v1447 = vunpack.c.l.b16 %v1392
        %v1448 = vunpack.c.l.b16 %v1393
        %v1449 = vpack.c.b16 %v1426, %v1425
        %v1450 = vpack.c.b16 %v1428, %v1427
        %v1451 = vpack.c.b16 %v1430, %v1429
        %v1452 = vpack.c.b16 %v1432, %v1431
        %v1453 = vpack.c.b16 %v1434, %v1433
        %v1454 = vpack.c.b16 %v1436, %v1435
        %v1455 = vpack.c.b16 %v1438, %v1437
        %v1456 = vpack.c.b16 %v1440, %v1439
        %v1457 = vpack.c.b16 %v1442, %v1441
        %v1458 = vpack.c.b16 %v1444, %v1443
        %v1459 = vpack.c.b16 %v1446, %v1445
        %v1460 = vpack.c.b16 %v1448, %v1447
        %v1474 = vsel %vm995, %v1395, 0
        %1476 = vmatprep.subr.bf16.mxu0 0
        %1477 = vmatpush1.bf16.msra.mxu0 %v1449
        %1478 = vmatprep.subr.bf16.mxu0 0
        %1479 = vmatpush1.bf16.msra.mxu0 %v1450
        %1480 = vmatprep.subr.bf16.mxu0 0
        %1481 = vmatpush1.bf16.msra.mxu0 %v1451
        %1482 = vmatprep.subr.bf16.mxu0 0
        %1483 = vmatpush1.bf16.msra.mxu0 %v1452
        %1484 = vmatprep.subr.bf16.mxu0 0
        %1485 = vmatpush1.bf16.msra.mxu0 %v1453
        %1486 = vmatprep.subr.bf16.mxu0 0
        %1487 = vmatpush1.bf16.msra.mxu0 %v1454
        %1488 = vmatprep.subr.bf16.mxu0 0
        %1489 = vmatpush1.bf16.msra.mxu0 %v1455
        %1490 = vmatprep.subr.bf16.mxu0 0
        %1491 = vmatpush1.bf16.msra.mxu0 %v1456
        %1492 = vmatprep.subr.bf16.mxu0 0
        %1493 = vmatpush1.bf16.msra.mxu0 %v1457
        %1494 = vmatprep.subr.bf16.mxu0 0
        %1495 = vmatpush1.bf16.msra.mxu0 %v1458
        %1496 = vmatprep.subr.bf16.mxu0 0
        %1497 = vmatpush1.bf16.msra.mxu0 %v1459
        %1498 = vmatprep.subr.bf16.mxu0 0
        %1499 = vmatpush1.bf16.msra.mxu0 %v1460
        %1500 = vmatprep.subr.bf16.mxu0 0
        %1501 = vmatpush1.bf16.msra.mxu0 0
        %1502 = vmatprep.subr.bf16.mxu0 0
        %1503 = vmatpush1.bf16.msra.mxu0 0
        %1504 = vmatprep.subr.bf16.mxu0 0
        %1505 = vmatpush1.bf16.msra.mxu0 0
        %1506 = vmatprep.subr.bf16.mxu0 0
        %1507 = vmatpush1.bf16.msra.mxu0 0
        %1508 = vmatprep.mubr.bf16.mxu0 %v1474
        %1509 = vmatmul.mubr.bf16.gmra.mrb[0].mxu0 %v1394
        %v1510 = vpop.f32.mrb[0].mxu0
        %v1511 = vadd.f32 %v1400, %v1510
        %v1512 = vpop.f32.mrb[0].mxu0
        %v1513 = vpop.f32.mrb[0].mxu0
        %v1514 = vadd.f32 %v1400, %v1513
        %v1515 = vpop.f32.mrb[0].mxu0
        %1516 = vdwg.mxu0
        %v1517 = vmax.f32 %v1511, 0.0
        %v1518 = vmax.f32 %v1514, 0.0
        %v1521 = vcombine.high %v1517, %v1517
        %v1523 = vunpack.c.l.s4 1983009808
        %v1524 = vunpack.c.0.s8 %v1523
        %v1525 = vlaneseq
        %v1526 = vshrl.u32 %v1525, 7
        %v1527 = vsub.s32 %v1524, %v1526
        %v1528 = vrot.slane %v1517, %v1527
        %v1530 = vunpack.c.l.s4 1983009808
        %v1531 = vunpack.c.0.s8 %v1530
        %v1532 = vlaneseq
        %v1533 = vshrl.u32 %v1532, 7
        %v1534 = vsub.s32 %v1531, %v1533
        %v1535 = vrot.slane %v1521, %v1534
        %v1536 = vcombine.high %v1528, %v1528
        %v1537 = vcombine.high %v1535, %v1535
        %v1538 = vcombine.high %v1518, %v1518
        %v1540 = vunpack.c.l.s4 1983009808
        %v1541 = vunpack.c.0.s8 %v1540
        %v1542 = vlaneseq
        %v1543 = vshrl.u32 %v1542, 7
        %v1544 = vsub.s32 %v1541, %v1543
        %v1545 = vrot.slane %v1518, %v1544
        %v1547 = vunpack.c.l.s4 1983009808
        %v1548 = vunpack.c.0.s8 %v1547
        %v1549 = vlaneseq
        %v1550 = vshrl.u32 %v1549, 7
        %v1551 = vsub.s32 %v1548, %v1550
        %v1552 = vrot.slane %v1538, %v1551
        %v1553 = vcombine.high %v1545, %v1545
        %v1554 = vcombine.high %v1552, %v1552
        %vm1563 = vcmask 1041408
        %v1564 = vsel %vm1563, %v1528, -inf
        %v1565 = vrot.slane %v1564, 4
        %v1566 = vmax.f32 %v1564, %v1565
        %v1567 = vrot.slane %v1566, 2
        %v1568 = vmax.f32 %v1566, %v1567
        %v1569 = vrot.slane %v1568, 1
        %v1570 = vmax.f32 %v1568, %v1569
        %v1571 = vsel %vm1563, %v1536, -inf
        %v1572 = vrot.slane %v1571, 4
        %v1573 = vmax.f32 %v1571, %v1572
        %v1574 = vrot.slane %v1573, 2
        %v1575 = vmax.f32 %v1573, %v1574
        %v1576 = vrot.slane %v1575, 1
        %v1577 = vmax.f32 %v1575, %v1576
        %v1578 = vsel %vm1563, %v1535, -inf
        %v1579 = vrot.slane %v1578, 4
        %v1580 = vmax.f32 %v1578, %v1579
        %v1581 = vrot.slane %v1580, 2
        %v1582 = vmax.f32 %v1580, %v1581
        %v1583 = vrot.slane %v1582, 1
        %v1584 = vmax.f32 %v1582, %v1583
        %v1585 = vsel %vm1563, %v1537, -inf
        %v1586 = vrot.slane %v1585, 4
        %v1587 = vmax.f32 %v1585, %v1586
        %v1588 = vrot.slane %v1587, 2
        %v1589 = vmax.f32 %v1587, %v1588
        %v1590 = vrot.slane %v1589, 1
        %v1591 = vmax.f32 %v1589, %v1590
        %v1592 = vsel %vm1563, %v1545, -inf
        %v1593 = vrot.slane %v1592, 4
        %v1594 = vmax.f32 %v1592, %v1593
        %v1595 = vrot.slane %v1594, 2
        %v1596 = vmax.f32 %v1594, %v1595
        %v1597 = vrot.slane %v1596, 1
        %v1598 = vmax.f32 %v1596, %v1597
        %v1599 = vsel %vm1563, %v1553, -inf
        %v1600 = vrot.slane %v1599, 4
        %v1601 = vmax.f32 %v1599, %v1600
        %v1602 = vrot.slane %v1601, 2
        %v1603 = vmax.f32 %v1601, %v1602
        %v1604 = vrot.slane %v1603, 1
        %v1605 = vmax.f32 %v1603, %v1604
        %v1606 = vsel %vm1563, %v1552, -inf
        %v1607 = vrot.slane %v1606, 4
        %v1608 = vmax.f32 %v1606, %v1607
        %v1609 = vrot.slane %v1608, 2
        %v1610 = vmax.f32 %v1608, %v1609
        %v1611 = vrot.slane %v1610, 1
        %v1612 = vmax.f32 %v1610, %v1611
        %v1613 = vsel %vm1563, %v1554, -inf
        %v1614 = vrot.slane %v1613, 4
        %v1615 = vmax.f32 %v1613, %v1614
        %v1616 = vrot.slane %v1615, 2
        %v1617 = vmax.f32 %v1615, %v1616
        %v1618 = vrot.slane %v1617, 1
        %v1619 = vmax.f32 %v1617, %v1618
        %v1628 = vsel %vm895, %v1577, %v1570
        %v1629 = vsel %vm897, %v1584, %v1628
        %v1630 = vsel %vm899, %v1591, %v1629
        %v1631 = vsel %vm901, %v1598, %v1630
        %v1632 = vsel %vm903, %v1605, %v1631
        %v1633 = vsel %vm905, %v1612, %v1632
        %v1634 = vsel %vm907, %v1619, %v1633
        %v1636 = vrot.slane %v1634, 7
        %v1637 = vsel %vm202, 0.0, %v1636
        %vm1638 = vcmp.eq.s32.totalorder %v194, 7
        %v1639 = vrot.slane %v1634, 1
        %v1640 = vsel %vm1638, 0.0, %v1639
        %v1641 = vld [vmem:[#allocation2 + $0x98] sm:$0xf]
        %v1642 = vld [vmem:[#allocation2 + $0x9c] sm:$0xf]
        %v1643 = vld [vmem:[#allocation2 + $0xa0] sm:$0xf]
        %v1644 = vld [vmem:[#allocation2 + $0xa4] sm:$0xf]
        %v1645 = vld [vmem:[#allocation2 + $0xa8] sm:$0xf]
        %v1646 = vld [vmem:[#allocation2 + $0xac] sm:$0xf]
        %v1647 = vld [vmem:[#allocation2 + $0xb0] sm:$0xf]
        %v1648 = vld [vmem:[#allocation2 + $0xb4] sm:$0xf]
        %v1649 = vld [vmem:[#allocation2 + $0xb8] sm:$0xf]
        %v1650 = vld [vmem:[#allocation2 + $0xbc] sm:$0xf]
        %v1651 = vld [vmem:[#allocation2 + $0xc0] sm:$0xf]
        %v1652 = vld [vmem:[#allocation2 + $0xc4] sm:$0xf]
        %v1653 = vld [vmem:[#allocation2 + $0xc8] sm:$0xf]
        %v1654 = vld [vmem:[#allocation2 + $0xcc] sm:$0xf]
        %v1655 = vld [vmem:[#allocation2 + $0xd0] sm:$0xf]
        %v1656 = vld [vmem:[#allocation2 + $0xd4] sm:$0xf]
        %v1657 = vld [vmem:[#allocation2 + $0xd8] sm:$0xf]
        %v1658 = vld [vmem:[#allocation2 + $0xdc] sm:$0xf]
        %v1659 = vld [vmem:[#allocation2 + $0xe0] sm:$0xf]
        %v1660 = vld [vmem:[#allocation2 + $0xe4] sm:$0xf]
        %v1661 = vld [vmem:[#allocation2 + $0xe8] sm:$0xf]
        %v1662 = vld [vmem:[#allocation2 + $0xec] sm:$0xf]
        %v1663 = vld [vmem:[#allocation2 + $0xf0] sm:$0xf]
        %v1664 = vld [vmem:[#allocation2 + $0xf4] sm:$0xf]
        %v1665 = vld [vmem:[#allocation2 + $0xf8] sm:$0xf]
        %v1666 = vld [vmem:[#allocation2 + $0xfc] sm:$0xf]
        %v1667 = vld [vmem:[#allocation2 + $0x100] sm:$0xf]
        %v1668 = vld [vmem:[#allocation2 + $0x104] sm:$0xf]
        %v1669 = vld [vmem:[#allocation2 + $0x108] sm:$0xf]
        %v1670 = vld [vmem:[#allocation2 + $0x10c] sm:$0xf]
        %v1671 = vld [vmem:[#allocation2 + $0x110] sm:$0xf]
        %v1672 = vld [vmem:[#allocation2 + $0x114] sm:$0xf]
        %v1673 = vld [vmem:[#allocation2 + $0x118] sm:$0xf]
        %v1674 = vld [vmem:[#allocation2 + $0x11c] sm:$0xf]
        %v1675 = vld [vmem:[#allocation2 + $0x120] sm:$0xf]
        %v1676 = vld [vmem:[#allocation2 + $0x124] sm:$0xf]
        %v1677 = vld [vmem:[#allocation2 + $0x128] sm:$0xf]
        %v1678 = vld [vmem:[#allocation2 + $0x12c] sm:$0xf]
        %v1679 = vld [vmem:[#allocation2 + $0x130] sm:$0xf]
        %v1680 = vld [vmem:[#allocation2 + $0x134] sm:$0xf]
        %v1681 = vld [vmem:[#allocation2 + $0x138] sm:$0xf]
        %v1682 = vld [vmem:[#allocation2 + $0x13c] sm:$0xf]
        %v1683 = vld [vmem:[#allocation2 + $0x140] sm:$0xf]
        %v1684 = vld [vmem:[#allocation2 + $0x144] sm:$0xf]
        %v1685 = vld [vmem:[#allocation2 + $0x148] sm:$0xf]
        %v1686 = vld [vmem:[#allocation2 + $0x14c] sm:$0xf]
        %v1687 = vld [vmem:[#allocation2 + $0x150] sm:$0xf]
        %v1688 = vld [vmem:[#allocation2 + $0x154] sm:$0xf]
        %v1689 = vpack.c.bf16 %v1637, %v1637
        %v1690 = vpack.c.bf16 %v1634, %v1634
        %v1691 = vpack.c.bf16 %v1640, %v1640
        %v1692 = vld [vmem:[%s2 + $0x3] sm:$0x1]
        %v1693 = vlaneseq
        %v1694 = vshrl.u32 %v1693, 7
        %v1695 = vsub.s32 0, %v1694
        %v1696 = vrot.slane %v1692, %v1695
        %v1745 = vunpack.c.l.b16 %v1641
        %v1746 = vunpack.c.l.b16 %v1642
        %v1747 = vunpack.c.l.b16 %v1643
        %v1748 = vunpack.c.l.b16 %v1644
        %v1749 = vunpack.c.l.b16 %v1645
        %v1750 = vunpack.c.l.b16 %v1646
        %v1751 = vunpack.c.l.b16 %v1647
        %v1752 = vunpack.c.l.b16 %v1648
        %v1753 = vunpack.c.l.b16 %v1649
        %v1754 = vunpack.c.l.b16 %v1650
        %v1755 = vunpack.c.l.b16 %v1651
        %v1756 = vunpack.c.l.b16 %v1652
        %v1757 = vunpack.c.l.b16 %v1653
        %v1758 = vunpack.c.l.b16 %v1654
        %v1759 = vunpack.c.l.b16 %v1655
        %v1760 = vunpack.c.l.b16 %v1656
        %v1761 = vunpack.c.l.b16 %v1657
        %v1762 = vunpack.c.l.b16 %v1658
        %v1763 = vunpack.c.l.b16 %v1659
        %v1764 = vunpack.c.l.b16 %v1660
        %v1765 = vunpack.c.l.b16 %v1661
        %v1766 = vunpack.c.l.b16 %v1662
        %v1767 = vunpack.c.l.b16 %v1663
        %v1768 = vunpack.c.l.b16 %v1664
        %v1769 = vunpack.c.l.b16 %v1665
        %v1770 = vunpack.c.l.b16 %v1666
        %v1771 = vunpack.c.l.b16 %v1667
        %v1772 = vunpack.c.l.b16 %v1668
        %v1773 = vunpack.c.l.b16 %v1669
        %v1774 = vunpack.c.l.b16 %v1670
        %v1775 = vunpack.c.l.b16 %v1671
        %v1776 = vunpack.c.l.b16 %v1672
        %v1777 = vunpack.c.l.b16 %v1673
        %v1778 = vunpack.c.l.b16 %v1674
        %v1779 = vunpack.c.l.b16 %v1675
        %v1780 = vunpack.c.l.b16 %v1676
        %v1781 = vunpack.c.l.b16 %v1677
        %v1782 = vunpack.c.l.b16 %v1678
        %v1783 = vunpack.c.l.b16 %v1679
        %v1784 = vunpack.c.l.b16 %v1680
        %v1785 = vunpack.c.l.b16 %v1681
        %v1786 = vunpack.c.l.b16 %v1682
        %v1787 = vunpack.c.l.b16 %v1683
        %v1788 = vunpack.c.l.b16 %v1684
        %v1789 = vunpack.c.l.b16 %v1685
        %v1790 = vunpack.c.l.b16 %v1686
        %v1791 = vunpack.c.l.b16 %v1687
        %v1792 = vunpack.c.l.b16 %v1688
        %v1793 = vpack.c.b16 %v1746, %v1745
        %v1794 = vpack.c.b16 %v1748, %v1747
        %v1795 = vpack.c.b16 %v1750, %v1749
        %v1796 = vpack.c.b16 %v1752, %v1751
        %v1797 = vpack.c.b16 %v1754, %v1753
        %v1798 = vpack.c.b16 %v1756, %v1755
        %v1799 = vpack.c.b16 %v1758, %v1757
        %v1800 = vpack.c.b16 %v1760, %v1759
        %v1801 = vpack.c.b16 %v1762, %v1761
        %v1802 = vpack.c.b16 %v1764, %v1763
        %v1803 = vpack.c.b16 %v1766, %v1765
        %v1804 = vpack.c.b16 %v1768, %v1767
        %v1805 = vpack.c.b16 %v1770, %v1769
        %v1806 = vpack.c.b16 %v1772, %v1771
        %v1807 = vpack.c.b16 %v1774, %v1773
        %v1808 = vpack.c.b16 %v1776, %v1775
        %v1809 = vpack.c.b16 %v1778, %v1777
        %v1810 = vpack.c.b16 %v1780, %v1779
        %v1811 = vpack.c.b16 %v1782, %v1781
        %v1812 = vpack.c.b16 %v1784, %v1783
        %v1813 = vpack.c.b16 %v1786, %v1785
        %v1814 = vpack.c.b16 %v1788, %v1787
        %v1815 = vpack.c.b16 %v1790, %v1789
        %v1816 = vpack.c.b16 %v1792, %v1791
        %1841 = vmatprep.subr.bf16.mxu0 0
        %1842 = vmatpush1.bf16.msra.mxu0 %v1793
        %1843 = vmatprep.subr.bf16.mxu0 0
        %1844 = vmatpush1.bf16.msra.mxu0 %v1794
        %1845 = vmatprep.subr.bf16.mxu0 0
        %1846 = vmatpush1.bf16.msra.mxu0 %v1795
        %1847 = vmatprep.subr.bf16.mxu0 0
        %1848 = vmatpush1.bf16.msra.mxu0 %v1796
        %1849 = vmatprep.subr.bf16.mxu0 0
        %1850 = vmatpush1.bf16.msra.mxu0 %v1797
        %1851 = vmatprep.subr.bf16.mxu0 0
        %1852 = vmatpush1.bf16.msra.mxu0 %v1798
        %1853 = vmatprep.subr.bf16.mxu0 0
        %1854 = vmatpush1.bf16.msra.mxu0 %v1799
        %1855 = vmatprep.subr.bf16.mxu0 0
        %1856 = vmatpush1.bf16.msra.mxu0 %v1800
        %1857 = vmatprep.subr.bf16.mxu0 0
        %1858 = vmatpush1.bf16.msra.mxu0 %v1801
        %1859 = vmatprep.subr.bf16.mxu0 0
        %1860 = vmatpush1.bf16.msra.mxu0 %v1802
        %1861 = vmatprep.subr.bf16.mxu0 0
        %1862 = vmatpush1.bf16.msra.mxu0 %v1803
        %1863 = vmatprep.subr.bf16.mxu0 0
        %1864 = vmatpush1.bf16.msra.mxu0 %v1804
        %1865 = vmatprep.subr.bf16.mxu0 0
        %1866 = vmatpush1.bf16.msra.mxu0 %v1805
        %1867 = vmatprep.subr.bf16.mxu0 0
        %1868 = vmatpush1.bf16.msra.mxu0 %v1806
        %1869 = vmatprep.subr.bf16.mxu0 0
        %1870 = vmatpush1.bf16.msra.mxu0 %v1807
        %1871 = vmatprep.subr.bf16.mxu0 0
        %1872 = vmatpush1.bf16.msra.mxu0 %v1808
        %1873 = vmatprep.mubr.bf16.mxu0 %v1690
        %1874 = vmatmul.mubr.bf16.gmra.mrb[0].mxu0 %v1689
        %v1875 = vpop.f32.mrb[0].mxu0
        %v1876 = vadd.f32 %v1696, %v1875
        %v1877 = vpop.f32.mrb[0].mxu0
        %v1878 = vpop.f32.mrb[0].mxu0
        %v1879 = vpop.f32.mrb[0].mxu0
        %1880 = vdwg.mxu0
        %1881 = vmatprep.subr.bf16.mxu0 0
        %1882 = vmatpush1.bf16.msra.mxu0 %v1809
        %1883 = vmatprep.subr.bf16.mxu0 0
        %1884 = vmatpush1.bf16.msra.mxu0 %v1810
        %1885 = vmatprep.subr.bf16.mxu0 0
        %1886 = vmatpush1.bf16.msra.mxu0 %v1811
        %1887 = vmatprep.subr.bf16.mxu0 0
        %1888 = vmatpush1.bf16.msra.mxu0 %v1812
        %1889 = vmatprep.subr.bf16.mxu0 0
        %1890 = vmatpush1.bf16.msra.mxu0 %v1813
        %1891 = vmatprep.subr.bf16.mxu0 0
        %1892 = vmatpush1.bf16.msra.mxu0 %v1814
        %1893 = vmatprep.subr.bf16.mxu0 0
        %1894 = vmatpush1.bf16.msra.mxu0 %v1815
        %1895 = vmatprep.subr.bf16.mxu0 0
        %1896 = vmatpush1.bf16.msra.mxu0 %v1816
        %1897 = vmatprep.subr.bf16.mxu0 0
        %1898 = vmatpush1.bf16.msra.mxu0 0
        %1899 = vmatprep.subr.bf16.mxu0 0
        %1900 = vmatpush1.bf16.msra.mxu0 0
        %1901 = vmatprep.subr.bf16.mxu0 0
        %1902 = vmatpush1.bf16.msra.mxu0 0
        %1903 = vmatprep.subr.bf16.mxu0 0
        %1904 = vmatpush1.bf16.msra.mxu0 0
        %1905 = vmatprep.subr.bf16.mxu0 0
        %1906 = vmatpush1.bf16.msra.mxu0 0
        %1907 = vmatprep.subr.bf16.mxu0 0
        %1908 = vmatpush1.bf16.msra.mxu0 0
        %1909 = vmatprep.subr.bf16.mxu0 0
        %1910 = vmatpush1.bf16.msra.mxu0 0
        %1911 = vmatprep.subr.bf16.mxu0 0
        %1912 = vmatpush1.bf16.msra.mxu0 0
        %1913 = vmatprep.mubr.bf16.mxu0 0
        %1914 = vmatmul.mubr.bf16.gmra.mrb[0].mxu0 %v1691
        %v1915 = vpop.f32.mrb[0].mxu0
        %v1916 = vadd.f32 %v1876, %v1915
        %v1917 = vpop.f32.mrb[0].mxu0
        %v1918 = vpop.f32.mrb[0].mxu0
        %v1919 = vpop.f32.mrb[0].mxu0
        %1920 = vdwg.mxu0
        %v1921 = vmax.f32 %v1916, 0.0
        %v1923 = vcombine.high %v1921, %v1921
        %v1925 = vunpack.c.l.s4 1983009808
        %v1926 = vunpack.c.0.s8 %v1925
        %v1927 = vlaneseq
        %v1928 = vshrl.u32 %v1927, 7
        %v1929 = vsub.s32 %v1926, %v1928
        %v1930 = vrot.slane %v1921, %v1929
        %v1932 = vunpack.c.l.s4 1983009808
        %v1933 = vunpack.c.0.s8 %v1932
        %v1934 = vlaneseq
        %v1935 = vshrl.u32 %v1934, 7
        %v1936 = vsub.s32 %v1933, %v1935
        %v1937 = vrot.slane %v1923, %v1936
        %v1938 = vcombine.high %v1930, %v1930
        %v1939 = vcombine.high %v1937, %v1937
        %v1944 = vsel %vm1203, %v1930, -inf
        %v1945 = vrot.slane %v1944, 4
        %v1946 = vmax.f32 %v1944, %v1945
        %v1947 = vrot.slane %v1946, 2
        %v1948 = vmax.f32 %v1946, %v1947
        %v1949 = vrot.slane %v1948, 1
        %v1950 = vmax.f32 %v1948, %v1949
        %v1951 = vsel %vm1203, %v1938, -inf
        %v1952 = vrot.slane %v1951, 4
        %v1953 = vmax.f32 %v1951, %v1952
        %v1954 = vrot.slane %v1953, 2
        %v1955 = vmax.f32 %v1953, %v1954
        %v1956 = vrot.slane %v1955, 1
        %v1957 = vmax.f32 %v1955, %v1956
        %v1958 = vsel %vm1203, %v1937, -inf
        %v1959 = vrot.slane %v1958, 4
        %v1960 = vmax.f32 %v1958, %v1959
        %v1961 = vrot.slane %v1960, 2
        %v1962 = vmax.f32 %v1960, %v1961
        %v1963 = vrot.slane %v1962, 1
        %v1964 = vmax.f32 %v1962, %v1963
        %v1965 = vsel %vm1203, %v1939, -inf
        %v1966 = vrot.slane %v1965, 4
        %v1967 = vmax.f32 %v1965, %v1966
        %v1968 = vrot.slane %v1967, 2
        %v1969 = vmax.f32 %v1967, %v1968
        %v1970 = vrot.slane %v1969, 1
        %v1971 = vmax.f32 %v1969, %v1970
        %v1976 = vsel %vm895, %v1957, %v1950
        %v1977 = vsel %vm897, %v1964, %v1976
        %v1978 = vsel %vm899, %v1971, %v1977
        %vm1980 = vcmask 519168
        %1981 = vst.msk [vmem:[%s178] sm:$0xf] %vm1980, %v1978
        %s1982 = sand.u32 %s94, 1
        %s1983 = scalar_lea.sflag [#allocation4], %s1982
        %s1984 = sand.u32 %s94, 1
        %s1985 = smul.addr %s1984, 4
        %s1986 = scalar_lea.vmem [#allocation5], %s1985
        // Predicated region
        $region37: #{tpu_custom_call.1} parent=31 // pred_check
          %p1987 = pneg %p104
        $region38: #{tpu_custom_call.1} parent=31 // pred_check_branch
          %1989 = sbr.rel (%p1987) target = $region40
        $region39: #{tpu_custom_call.1} parent=31 // pred_region
          %s1991 = ssub.s32 64, 64
          %1992 = vsyncadd %s1983, %s1991
          %s1993 = smul.addr %s18, 64
          %s1994 = scalar_lea.hbm %s3, %s1993
          %s1996 = sshll.u32 %s1986, 4
          %s1997 = int_to_ptr.vmem [resolvable:$true] %s1996
          %1999 = dma.vmem_to_hbm [thread:$0]  %s1997, 64, %s1994, %s1983
        $region40: #{tpu_custom_call.1} parent=31 // pred_fallthru
          _
      $region32: #{tpu_custom_call.1} parent=5 // pred_fallthru
        _
      %p2000 = scmp.le.s32.totalorder 2, %s13
      // Predicated region
      $region41: #{tpu_custom_call.1} parent=5 // pred_check
        %p2001 = pneg %p2000
      $region42: #{tpu_custom_call.1} parent=5 // pred_check_branch
        %2003 = sbr.rel (%p2001) target = $region44
      $region43: #{tpu_custom_call.1} parent=5 // pred_region
        %s2004 = ssub.s32 %s13, 2
        // Predicated region
        $region45: #{tpu_custom_call.1} parent=43 // pred_check
          %p2005 = pneg %p110
        $region46: #{tpu_custom_call.1} parent=43 // pred_check_branch
          %2007 = sbr.rel (%p2005) target = $region48
        $region47: #{tpu_custom_call.1} parent=43 // pred_region
          %s2008 = sand.u32 %s95, 1
          %s2009 = scalar_lea.sflag [#allocation4], %s2008
          %s2010 = sand.u32 %s95, 1
          %s2011 = smul.addr %s2010, 4
          %s2012 = scalar_lea.vmem [#allocation5], %s2011
          %2013 = dma.done %s2009, 64
        $region48: #{tpu_custom_call.1} parent=43 // pred_fallthru
          _
      $region44: #{tpu_custom_call.1} parent=5 // pred_fallthru
        _
    $region6: #{tpu_custom_call.1} parent=1 // loop_footer
      %s17 = sadd.s32 1, %s13
    $region7: #{tpu_custom_call.1} parent=1 // loop_footer_branch
      %12 = sbr.rel target = $region3
    $region8: #{tpu_custom_call.1} parent=1 // loop_exit
      _
    %2014 = vsyncpa [#allocation3], 1
    %s2015 = scalar_lea.sflag [#allocation3], 1
    %2016 = vsyncpa %s2015, 1
    %2017 = vsyncpa [#allocation4], 1
    %s2018 = scalar_lea.sflag [#allocation4], 1
    %2019 = vsyncpa %s2018, 1

</llo_original>
